<compile_context>
chip_gen: v7x
topology: tpu7x:2x2x1
jax: 0.10.0
libtpu: 0.0.40
codegen_flags: <defaults>
</compile_context>

<pallas_src>
import math

import jax
import jax.numpy as jnp
from jax.experimental import pallas as pl
from jax.experimental.pallas import tpu as pltpu


# ----------------------------------------------------------------------------
# helpers
# ----------------------------------------------------------------------------
def _vmem_capacity_bytes() -> int:
    """Generation-aware physical VMEM capacity; conservative 64 MiB fallback."""
    try:
        info = pltpu.get_tpu_info()
        cap = int(getattr(info, "vmem_capacity_bytes", 0))
        if cap > 0:
            return cap
    except Exception:
        pass
    return 64 << 20   # v7x-sized fallback keeps us safe on every generation


def _pick_hw_tile(hw: int, max_tile: int) -> int:
    """Largest multiple of 128 that divides hw and is <= max_tile (hw % 128 == 0)."""
    assert hw % 128 == 0, hw
    t = max((min(max_tile, hw) // 128) * 128, 128)
    while hw % t != 0:
        t -= 128
    return t


_SIG_THRESH = 1.0 + math.log(4.0)   # sigmoid(x - 1) > 0.8  <=>  x > 1 + ln 4


# ----------------------------------------------------------------------------
# Kernel 1: run_decoder compositing + fused error_last + fused glue concats
#   mask      = softmax(cat(mask_logits, ones), dim=slot)
#   mask_raw  = softmax(cat(mask_raw, ones), dim=ch)[:, :1]  == sigmoid(x - 1)
#   occlusion = clamp(1 - sum(mask_fg > .8)/(sum(mask_raw > .8) + 1e-8), 0, 1)
#   out_rgb   = sum_o mask[o] * rgb[o]     (incl. background slot)
#   out_depth = sum_o mask[o] * depth[o]
#   error     = relu(uncertainty - sum(mask[:, :-1]))
#   rgb_cat   = cat(rgb_slots, bg_rgb)   ;  depth_cat = cat(depth_slots, bg_depth)
# ----------------------------------------------------------------------------
def _composite_kernel(mask_ref, rgb_ref, depth_ref, mraw_ref,
                      bg_rgb_ref, bg_depth_ref, unc_ref,
                      mask_out_ref, rgb_out_ref, depth_out_ref,
                      mraw_out_ref, err_out_ref,
                      rgbcat_ref, depcat_ref, num_ref, den_ref):
    f32 = jnp.float32
    m = mask_ref[0].astype(f32)                                # (S, T)
    S = m.shape[0]

    # slot softmax with implicit appended background logit of 1.0 (max-shifted)
    mx = jnp.maximum(jnp.max(m, axis=0, keepdims=True), 1.0)   # (1, T)
    e_fg = jnp.exp(m - mx)                                     # (S, T)
    e_bg = jnp.exp(1.0 - mx)                                   # (1, T)
    sum_fg = jnp.sum(e_fg, axis=0, keepdims=True)              # (1, T)
    denom = sum_fg + e_bg
    inv = pl.reciprocal(denom, approx=True)                    # EUP slot
    inv = inv * (2.0 - denom * inv)                            # one Newton step
    mask_fg = e_fg * inv                                       # (S, T)
    mask_bg = e_bg * inv                                       # (1, T)

    # direct slice stores (no concat / sublane shuffle)
    mask_out_ref[0, :S] = mask_fg.astype(mask_out_ref.dtype)
    mask_out_ref[0, S:] = mask_bg.astype(mask_out_ref.dtype)

    # composited rgb: per-slot contiguous (3, T) loads (no strided channel slice)
    comp_rgb = mask_bg * bg_rgb_ref[0].astype(f32)             # (3, T)
    for s in range(S):
        comp_rgb = comp_rgb + (mask_fg[s:s + 1]
                               * rgb_ref[0, 3 * s:3 * s + 3].astype(f32))
    rgb_out_ref[0] = comp_rgb.astype(rgb_out_ref.dtype)

    # composited depth
    dep = depth_ref[0].astype(f32)                             # (S, T)
    comp_d = (jnp.sum(mask_fg * dep, axis=0, keepdims=True)
              + mask_bg * bg_depth_ref[0].astype(f32))
    depth_out_ref[0] = comp_d.astype(depth_out_ref.dtype)

    # mask_raw: softmax([x, 1]) first channel == sigmoid(x - 1), stable form.
    xr = mraw_ref[0].astype(f32)                               # raw logits (S, T)
    x1 = xr - 1.0
    z = jnp.exp(-jnp.abs(x1))
    dz = 1.0 + z
    inv_z = pl.reciprocal(dz, approx=True)
    inv_z = inv_z * (2.0 - dz * inv_z)                         # Newton step
    mraw = jnp.where(x1 >= 0.0, inv_z, z * inv_z)
    mraw_out_ref[0] = mraw.astype(mraw_out_ref.dtype)

    # fused error_last = relu(uncertainty - sum(mask[:, :-1]))
    fg_total = sum_fg * inv                                    # == sum(mask_fg)
    err_out_ref[0] = jnp.maximum(unc_ref[0].astype(f32) - fg_total,
                                 0.0).astype(err_out_ref.dtype)

    # fused glue concats: rgb = cat(rgb, bg_rgb) ; depth = cat(depth, bg_depth)
    rgbcat_ref[0, :3 * S] = rgb_ref[0].astype(rgbcat_ref.dtype)
    rgbcat_ref[0, 3 * S:] = bg_rgb_ref[0].astype(rgbcat_ref.dtype)
    depcat_ref[0, :S] = depth_ref[0].astype(depcat_ref.dtype)
    depcat_ref[0, S:] = bg_depth_ref[0].astype(depcat_ref.dtype)

    # occlusion partial counts, exact thresholds (no divide involved):
    #   mask_fg > 0.8        <=>  e_fg  > 0.8 * denom
    #   sigmoid(x - 1) > 0.8 <=>  x_raw > 1 + ln 4
    num_ref[0] = jnp.sum((e_fg > 0.8 * denom).astype(f32), axis=-1, keepdims=True)
    den_ref[0] = jnp.sum((xr > _SIG_THRESH).astype(f32), axis=-1, keepdims=True)


def run_decoder_composite(mask_logits, rgb_slots, depth_slots, mask_raw,
                          bg_rgb, bg_depth, uncertainty,
                          *, hw_tile=None, image_out_dtype=None):
    """Pallas implementation of the compositing part of Loci.run_decoder with
    error_last (from Loci.forward) and the background concats fused in.

    Args (NCHW, PyTorch-compatible):
      mask_logits : (B, S, H, W)     decoder mask logits per slot
      rgb_slots   : (B, 3*S, H, W)   decoder rgb per slot, channel order '(o c)'
      depth_slots : (B, S, H, W)
      mask_raw    : (B, S, H, W)     raw (unprioritized) mask logits
      bg_rgb      : (B, 3, H, W)
      bg_depth    : (B, 1, H, W)
      uncertainty : (B, 1, H, W)
      image_out_dtype : optional dtype override (e.g. jnp.bfloat16) for the
        image-sized outputs; all math stays f32 inside the kernel.
    """
    B, S, H, W = mask_logits.shape
    assert rgb_slots.shape[1] == 3 * S, rgb_slots.shape
    HW = H * W
    f32 = jnp.float32

    def od(d):
        return jnp.dtype(image_out_dtype if image_out_dtype is not None else d)

    mask_dt = od(mask_logits.dtype)
    orgb_dt = od(jnp.result_type(mask_logits.dtype, rgb_slots.dtype, bg_rgb.dtype))
    odep_dt = od(jnp.result_type(mask_logits.dtype, depth_slots.dtype, bg_depth.dtype))
    mraw_dt = od(mask_raw.dtype)
    err_dt = od(jnp.result_type(uncertainty.dtype, mask_logits.dtype))
    rgbcat_dt = od(jnp.result_type(rgb_slots.dtype, bg_rgb.dtype))
    depcat_dt = od(jnp.result_type(depth_slots.dtype, bg_depth.dtype))

    # flatten spatial axis; no wrapper-side dtype conversions (no extra HBM pass)
    m = mask_logits.reshape(B, S, HW)
    rgb = rgb_slots.reshape(B, 3 * S, HW)          # slot-major '(o c)' layout
    dep = depth_slots.reshape(B, S, HW)
    mr = mask_raw.reshape(B, S, HW)
    bgr = bg_rgb.reshape(B, 3, HW)
    bgd = bg_depth.reshape(B, 1, HW)
    unc = uncertainty.reshape(B, 1, HW)

    # ragged spatial extents: pad up to a multiple of 128 lanes. Mask / raw
    # logits pad with a large negative so padded lanes contribute exactly 0 to
    # the occlusion counts; everything else pads with 0 and is sliced off.
    pad = (-HW) % 128
    if pad:
        def _pad(x, value=0.0):
            return jnp.pad(x, ((0, 0), (0, 0), (0, pad)), constant_values=value)
        m, mr = _pad(m, -1e9), _pad(mr, -1e9)
        rgb, dep, bgr, bgd, unc = (_pad(x) for x in (rgb, dep, bgr, bgd, unc))
    HWp = HW + pad

    # VMEM-derived, generation-aware HW tile
    def isz(d):
        return jnp.dtype(d).itemsize

    per_lane = (S * isz(m.dtype) + 3 * S * isz(rgb.dtype) + S * isz(dep.dtype)
                + S * isz(mr.dtype) + 3 * isz(bgr.dtype) + isz(bgd.dtype)
                + isz(unc.dtype)
                + (S + 1) * isz(mask_dt) + 3 * isz(orgb_dt) + isz(odep_dt)
                + S * isz(mraw_dt) + isz(err_dt)
                + (3 * S + 3) * isz(rgbcat_dt) + (S + 1) * isz(depcat_dt))
    vmem_ceiling = min(_vmem_capacity_bytes() * 3 // 4, 112 << 20)
    if hw_tile is None:
        # 2x pipeline buffers + ~1x f32 temporaries within half of the ceiling
        max_tile = max((vmem_ceiling // 2) // (3 * per_lane), 128)
        tile = _pick_hw_tile(HWp, min(max_tile, 32768))
    else:
        tile = int(hw_tile)
    assert HWp % tile == 0 and tile % 128 == 0, (HWp, tile)
    n_hw = HWp // tile
    vmem_limit = int(min(max(3 * per_lane * tile + (4 << 20), 32 << 20),
                         vmem_ceiling))

    idx3 = lambda b, t: (b, 0, t)
    cnt_map = lambda b, t: (b * n_hw + t, 0, 0)

    out_shapes = (
        jax.ShapeDtypeStruct((B, S + 1, HWp), mask_dt),        # mask (softmax)
        jax.ShapeDtypeStruct((B, 3, HWp), orgb_dt),            # output_rgb
        jax.ShapeDtypeStruct((B, 1, HWp), odep_dt),            # output_depth
        jax.ShapeDtypeStruct((B, S, HWp), mraw_dt),            # mask_raw
        jax.ShapeDtypeStruct((B, 1, HWp), err_dt),             # error (fused)
        jax.ShapeDtypeStruct((B, 3 * S + 3, HWp), rgbcat_dt),  # rgb   = cat(rgb, bg)
        jax.ShapeDtypeStruct((B, S + 1, HWp), depcat_dt),      # depth = cat(depth, bg)
        jax.ShapeDtypeStruct((B * n_hw, S, 1), f32),           # occ num partials
        jax.ShapeDtypeStruct((B * n_hw, S, 1), f32),           # occ den partials
    )
    in_specs = [
        pl.BlockSpec((1, S, tile), idx3),
        pl.BlockSpec((1, 3 * S, tile), idx3),
        pl.BlockSpec((1, S, tile), idx3),
        pl.BlockSpec((1, S, tile), idx3),
        pl.BlockSpec((1, 3, tile), idx3),
        pl.BlockSpec((1, 1, tile), idx3),
        pl.BlockSpec((1, 1, tile), idx3),
    ]
    out_specs = (
        pl.BlockSpec((1, S + 1, tile), idx3),
        pl.BlockSpec((1, 3, tile), idx3),
        pl.BlockSpec((1, 1, tile), idx3),
        pl.BlockSpec((1, S, tile), idx3),
        pl.BlockSpec((1, 1, tile), idx3),
        pl.BlockSpec((1, 3 * S + 3, tile), idx3),
        pl.BlockSpec((1, S + 1, tile), idx3),
        pl.BlockSpec((1, S, 1), cnt_map),
        pl.BlockSpec((1, S, 1), cnt_map),
    )

    (mask, orgb, odep, mraw, err, rgbcat, depcat, num_p, den_p) = pl.pallas_call(
        _composite_kernel,
        out_shape=out_shapes,
        grid=(B, n_hw),
        in_specs=in_specs,
        out_specs=out_specs,
        compiler_params=pltpu.CompilerParams(
            # no resident accumulator -> both axes can shard across cores
            dimension_semantics=("parallel", "parallel"),
            vmem_limit_bytes=vmem_limit),
    )(m, rgb, dep, mr, bgr, bgd, unc)

    def unflat(x, c):
        return x[..., :HW].reshape(B, c, H, W)

    num = num_p.reshape(B, n_hw, S).sum(axis=1)
    den = den_p.reshape(B, n_hw, S).sum(axis=1)
    occlusion = jnp.clip(1.0 - num / (den + 1e-8), 0.0, 1.0)

    # TODO(synk): 'depth_raw' is a raw LociDecoder output (external module) and
    #             is therefore not produced here.
    return {
        "output_rgb": unflat(orgb, 3),
        "output_depth": unflat(odep, 1),
        "mask": unflat(mask, S + 1),
        "rgb": unflat(rgbcat, 3 * S + 3),
        "depth": unflat(depcat, S + 1),
        "mask_raw": unflat(mraw, S),
        "occlusion": occlusion,                                # (B, S)
        "error": unflat(err, 1),                               # fused error_last
    }


# ----------------------------------------------------------------------------
# Kernel 2 (standalone): error_last for a mask coming from a *previous* step
#   error = relu(uncertainty - sum(mask[:, :-1], dim=1, keepdim=True))
# ----------------------------------------------------------------------------
def _error_kernel(unc_ref, mask_ref, err_ref):
    s1 = mask_ref.shape[1]
    fg = jnp.sum(mask_ref[0, :s1 - 1].astype(jnp.float32), axis=0, keepdims=True)
    err_ref[0] = jnp.maximum(unc_ref[0].astype(jnp.float32) - fg,
                             0.0).astype(err_ref.dtype)


def error_last_fn(uncertainty, mask, *, hw_tile=None):
    """uncertainty: (B,1,H,W); mask: (B,S+1,H,W) -> (B,1,H,W)."""
    B, S1, H, W = mask.shape
    HW = H * W
    out_dt = jnp.result_type(uncertainty.dtype, mask.dtype)
    unc = uncertainty.reshape(B, 1, HW)
    msk = mask.reshape(B, S1, HW)
    pad = (-HW) % 128
    if pad:
        unc = jnp.pad(unc, ((0, 0), (0, 0), (0, pad)))
        msk = jnp.pad(msk, ((0, 0), (0, 0), (0, pad)))
    HWp = HW + pad
    tile = int(hw_tile) if hw_tile is not None else _pick_hw_tile(HWp, 16384)
    assert HWp % tile == 0 and tile % 128 == 0, (HWp, tile)
    n_hw = HWp // tile

    err = pl.pallas_call(
        _error_kernel,
        out_shape=jax.ShapeDtypeStruct((B, 1, HWp), out_dt),
        grid=(B, n_hw),
        in_specs=[pl.BlockSpec((1, 1, tile), lambda b, t: (b, 0, t)),
                  pl.BlockSpec((1, S1, tile), lambda b, t: (b, 0, t))],
        out_specs=pl.BlockSpec((1, 1, tile), lambda b, t: (b, 0, t)),
        compiler_params=pltpu.CompilerParams(
            dimension_semantics=("parallel", "parallel")),
    )(unc, msk)
    return err[..., :HW].reshape(B, 1, H, W)


# ----------------------------------------------------------------------------
# pure-JAX reference of the same compositing math (for correctness check)
# ----------------------------------------------------------------------------
def _reference_run_decoder(mask_logits, rgb_slots, depth_slots, mask_raw,
                           bg_rgb, bg_depth):
    B, S, H, W = mask_logits.shape
    ones = jnp.ones_like(mask_logits[:, :1])
    mask = jax.nn.softmax(jnp.concatenate([mask_logits, ones], axis=1), axis=1)
    rgb = jnp.concatenate([rgb_slots, bg_rgb], axis=1)
    depth = jnp.concatenate([depth_slots, bg_depth], axis=1)
    mraw = jax.nn.softmax(
        jnp.stack([mask_raw, jnp.ones_like(mask_raw)], axis=2), axis=2)[:, :, 0]
    num = jnp.sum((mask[:, :-1] > 0.8).astype(jnp.float32), axis=(2, 3))
    den = jnp.sum((mraw > 0.8).astype(jnp.float32), axis=(2, 3)) + 1e-8
    occ = jnp.clip(1.0 - num / den, 0.0, 1.0)
    _mask = mask[:, :, None]
    _rgb = rgb.reshape(B, S + 1, 3, H, W)
    _depth = depth.reshape(B, S + 1, 1, H, W)
    out_rgb = jnp.sum(_mask * _rgb, axis=1)
    out_depth = jnp.sum(_mask * _depth, axis=1)
    return mask, rgb, depth, out_rgb, out_depth, mraw, occ


if __name__ == "__main__":
    key = jax.random.PRNGKey(0)
    ks = jax.random.split(key, 7)

    # batch, num_slots, spatial; HW=1024 with hw_tile=512 -> 2 HW tiles / image
    B, S, H, W = 2, 4, 32, 32

    mask_logits = jax.random.normal(ks[0], (B, S, H, W), jnp.float32) * 2.0
    rgb_slots = jax.random.normal(ks[1], (B, 3 * S, H, W), jnp.float32)
    depth_slots = jax.random.normal(ks[2], (B, S, H, W), jnp.float32)
    mask_raw = jax.random.normal(ks[3], (B, S, H, W), jnp.float32) * 2.0
    bg_rgb = jax.random.normal(ks[4], (B, 3, H, W), jnp.float32)
    bg_depth = jax.random.normal(ks[5], (B, 1, H, W), jnp.float32)
    uncertainty = jax.nn.sigmoid(jax.random.normal(ks[6], (B, 1, H, W), jnp.float32))

    out = run_decoder_composite(mask_logits, rgb_slots, depth_slots, mask_raw,
                                bg_rgb, bg_depth, uncertainty, hw_tile=512)
    # second call exercises the VMEM-derived (generation-aware) tile path
    out_auto = run_decoder_composite(mask_logits, rgb_slots, depth_slots,
                                     mask_raw, bg_rgb, bg_depth, uncertainty)
    err_standalone = error_last_fn(uncertainty, out["mask"], hw_tile=512)
    jax.block_until_ready((out, out_auto, err_standalone))

    (ref_mask, ref_rgbcat, ref_depcat, ref_rgb, ref_depth, ref_mraw,
     ref_occ) = _reference_run_decoder(mask_logits, rgb_slots, depth_slots,
                                       mask_raw, bg_rgb, bg_depth)
    ref_err = jnp.maximum(
        uncertainty - jnp.sum(ref_mask[:, :-1], axis=1, keepdims=True), 0.0)

    def close(a, b, atol=2e-3, rtol=2e-3):
        return jnp.allclose(a, b, atol=atol, rtol=rtol)

    assert close(out["mask"], ref_mask)
    assert close(out["output_rgb"], ref_rgb)
    assert close(out["output_depth"], ref_depth)
    assert close(out["mask_raw"], ref_mraw)
    assert close(out["rgb"], ref_rgbcat)
    assert close(out["depth"], ref_depcat)
    assert close(out["error"], ref_err)
    assert close(err_standalone, ref_err)
    assert close(out_auto["mask"], ref_mask)
    assert close(out_auto["output_rgb"], ref_rgb)
    # occlusion uses exact in-kernel threshold comparisons; small slack only
    # for fp-rounding boundary pixels.
    assert jnp.allclose(out["occlusion"], ref_occ, atol=2e-2)
    assert jnp.allclose(out_auto["occlusion"], ref_occ, atol=2e-2)

    print("KERNEL_OK")
</pallas_src>

<mosaic_0001>
module attributes {stable_mosaic.version = 11 : i64} {
  func.func @_composite_kernel(%arg0: i32, %arg1: i32, %arg2: memref<1x4x512xf32, #tpu.memory_space<vmem>>, %arg3: memref<1x12x512xf32, #tpu.memory_space<vmem>>, %arg4: memref<1x4x512xf32, #tpu.memory_space<vmem>>, %arg5: memref<1x4x512xf32, #tpu.memory_space<vmem>>, %arg6: memref<1x3x512xf32, #tpu.memory_space<vmem>>, %arg7: memref<1x1x512xf32, #tpu.memory_space<vmem>>, %arg8: memref<1x1x512xf32, #tpu.memory_space<vmem>>, %arg9: memref<1x5x512xf32, #tpu.memory_space<vmem>>, %arg10: memref<1x3x512xf32, #tpu.memory_space<vmem>>, %arg11: memref<1x1x512xf32, #tpu.memory_space<vmem>>, %arg12: memref<1x4x512xf32, #tpu.memory_space<vmem>>, %arg13: memref<1x1x512xf32, #tpu.memory_space<vmem>>, %arg14: memref<1x15x512xf32, #tpu.memory_space<vmem>>, %arg15: memref<1x5x512xf32, #tpu.memory_space<vmem>>, %arg16: memref<1x4x1xf32, #tpu.memory_space<vmem>>, %arg17: memref<1x4x1xf32, #tpu.memory_space<vmem>>) attributes {dimension_semantics = [#tpu.dimension_semantics<parallel>, #tpu.dimension_semantics<parallel>], iteration_bounds = array<i64: 2, 2>, scalar_prefetch = 0 : i64, scratch_operands = 0 : i64, tpu.core_type = #tpu.core_type<tc>, window_params = [{transform_indices = @transform_0, window_bounds = array<i64: 1, 4, 512>}, {transform_indices = @transform_1, window_bounds = array<i64: 1, 12, 512>}, {transform_indices = @transform_2, window_bounds = array<i64: 1, 4, 512>}, {transform_indices = @transform_3, window_bounds = array<i64: 1, 4, 512>}, {transform_indices = @transform_4, window_bounds = array<i64: 1, 3, 512>}, {transform_indices = @transform_5, window_bounds = array<i64: 1, 1, 512>}, {transform_indices = @transform_6, window_bounds = array<i64: 1, 1, 512>}, {transform_indices = @transform_7, window_bounds = array<i64: 1, 5, 512>}, {transform_indices = @transform_8, window_bounds = array<i64: 1, 3, 512>}, {transform_indices = @transform_9, window_bounds = array<i64: 1, 1, 512>}, {transform_indices = @transform_10, window_bounds = array<i64: 1, 4, 512>}, {transform_indices = @transform_11, window_bounds = array<i64: 1, 1, 512>}, {transform_indices = @transform_12, window_bounds = array<i64: 1, 15, 512>}, {transform_indices = @transform_13, window_bounds = array<i64: 1, 5, 512>}, {transform_indices = @transform_14, window_bounds = array<i64: 1, 4, 1>}, {transform_indices = @transform_15, window_bounds = array<i64: 1, 4, 1>}]} {
    %c0 = arith.constant 0 : index
    %c0_0 = arith.constant 0 : index
    %c0_1 = arith.constant 0 : index
    %0 = vector.load %arg2[%c0, %c0_0, %c0_1] : memref<1x4x512xf32, #tpu.memory_space<vmem>>, vector<1x4x512xf32>
    %1 = vector.shape_cast %0 : vector<1x4x512xf32> to vector<4x512xf32>
    %cst = arith.constant dense<0xFF800000> : vector<512xf32>
    %2 = vector.multi_reduction <maximumf>, %1, %cst [0] : vector<4x512xf32> to vector<512xf32>
    %3 = vector.shape_cast %2 : vector<512xf32> to vector<1x512xf32>
    %cst_2 = arith.constant 1.000000e+00 : f32
    %4 = vector.broadcast %cst_2 : f32 to vector<1x512xf32>
    %5 = arith.maximumf %3, %4 : vector<1x512xf32>
    %6 = vector.broadcast %5 : vector<1x512xf32> to vector<4x512xf32>
    %7 = arith.subf %1, %6 : vector<4x512xf32>
    %8 = math.exp %7 : vector<4x512xf32>
    %cst_3 = arith.constant 1.000000e+00 : f32
    %9 = vector.broadcast %cst_3 : f32 to vector<1x512xf32>
    %10 = arith.subf %9, %5 : vector<1x512xf32>
    %11 = math.exp %10 : vector<1x512xf32>
    %cst_4 = arith.constant dense<0.000000e+00> : vector<512xf32>
    %12 = vector.multi_reduction <add>, %8, %cst_4 [0] : vector<4x512xf32> to vector<512xf32>
    %13 = vector.shape_cast %12 : vector<512xf32> to vector<1x512xf32>
    %14 = arith.addf %13, %11 : vector<1x512xf32>
    %15 = tpu.reciprocal %14 {approx = true} : vector<1x512xf32> -> vector<1x512xf32>
    %16 = arith.mulf %14, %15 : vector<1x512xf32>
    %cst_5 = arith.constant 2.000000e+00 : f32
    %17 = vector.broadcast %cst_5 : f32 to vector<1x512xf32>
    %18 = arith.subf %17, %16 : vector<1x512xf32>
    %19 = arith.mulf %15, %18 : vector<1x512xf32>
    %20 = vector.broadcast %19 : vector<1x512xf32> to vector<4x512xf32>
    %21 = arith.mulf %8, %20 : vector<4x512xf32>
    %22 = arith.mulf %11, %19 : vector<1x512xf32>
    %c0_6 = arith.constant 0 : index
    %c0_7 = arith.constant 0 : index
    %c0_8 = arith.constant 0 : index
    %23 = vector.load %arg9[%c0_6, %c0_7, %c0_8] : memref<1x5x512xf32, #tpu.memory_space<vmem>>, vector<1x4x512xf32>
    %24 = vector.shape_cast %23 : vector<1x4x512xf32> to vector<4x512xf32>
    %25 = vector.shape_cast %21 : vector<4x512xf32> to vector<1x4x512xf32>
    tpu.vector_store %arg9[%c0_6, %c0_7, %c0_8], %25 {strides = array<i32>} : memref<1x5x512xf32, #tpu.memory_space<vmem>>, vector<1x4x512xf32>,
    %c0_9 = arith.constant 0 : index
    %c4 = arith.constant 4 : index
    %c0_10 = arith.constant 0 : index
    %26 = vector.load %arg9[%c0_9, %c4, %c0_10] : memref<1x5x512xf32, #tpu.memory_space<vmem>>, vector<1x1x512xf32>
    %27 = vector.shape_cast %26 : vector<1x1x512xf32> to vector<1x512xf32>
    %28 = vector.shape_cast %22 : vector<1x512xf32> to vector<1x1x512xf32>
    tpu.vector_store %arg9[%c0_9, %c4, %c0_10], %28 {strides = array<i32>} : memref<1x5x512xf32, #tpu.memory_space<vmem>>, vector<1x1x512xf32>,
    %c0_11 = arith.constant 0 : index
    %c0_12 = arith.constant 0 : index
    %c0_13 = arith.constant 0 : index
    %29 = vector.load %arg6[%c0_11, %c0_12, %c0_13] : memref<1x3x512xf32, #tpu.memory_space<vmem>>, vector<1x3x512xf32>
    %30 = vector.shape_cast %29 : vector<1x3x512xf32> to vector<3x512xf32>
    %31 = vector.broadcast %22 : vector<1x512xf32> to vector<3x512xf32>
    %32 = arith.mulf %31, %30 : vector<3x512xf32>
    %33 = vector.extract_strided_slice %21 {offsets = [0, 0], sizes = [1, 512], strides = [1, 1]} : vector<4x512xf32> to vector<1x512xf32>
    %c0_14 = arith.constant 0 : index
    %c0_15 = arith.constant 0 : index
    %c0_16 = arith.constant 0 : index
    %34 = vector.load %arg3[%c0_14, %c0_15, %c0_16] : memref<1x12x512xf32, #tpu.memory_space<vmem>>, vector<1x3x512xf32>
    %35 = vector.shape_cast %34 : vector<1x3x512xf32> to vector<3x512xf32>
    %36 = vector.broadcast %33 : vector<1x512xf32> to vector<3x512xf32>
    %37 = arith.mulf %36, %35 : vector<3x512xf32>
    %38 = arith.addf %32, %37 : vector<3x512xf32>
    %39 = vector.extract_strided_slice %21 {offsets = [1, 0], sizes = [1, 512], strides = [1, 1]} : vector<4x512xf32> to vector<1x512xf32>
    %c0_17 = arith.constant 0 : index
    %c3 = arith.constant 3 : index
    %c0_18 = arith.constant 0 : index
    %40 = vector.load %arg3[%c0_17, %c3, %c0_18] : memref<1x12x512xf32, #tpu.memory_space<vmem>>, vector<1x3x512xf32>
    %41 = vector.shape_cast %40 : vector<1x3x512xf32> to vector<3x512xf32>
    %42 = vector.broadcast %39 : vector<1x512xf32> to vector<3x512xf32>
    %43 = arith.mulf %42, %41 : vector<3x512xf32>
    %44 = arith.addf %38, %43 : vector<3x512xf32>
    %45 = vector.extract_strided_slice %21 {offsets = [2, 0], sizes = [1, 512], strides = [1, 1]} : vector<4x512xf32> to vector<1x512xf32>
    %c0_19 = arith.constant 0 : index
    %c6 = arith.constant 6 : index
    %c0_20 = arith.constant 0 : index
    %46 = vector.load %arg3[%c0_19, %c6, %c0_20] : memref<1x12x512xf32, #tpu.memory_space<vmem>>, vector<1x3x512xf32>
    %47 = vector.shape_cast %46 : vector<1x3x512xf32> to vector<3x512xf32>
    %48 = vector.broadcast %45 : vector<1x512xf32> to vector<3x512xf32>
    %49 = arith.mulf %48, %47 : vector<3x512xf32>
    %50 = arith.addf %44, %49 : vector<3x512xf32>
    %51 = vector.extract_strided_slice %21 {offsets = [3, 0], sizes = [1, 512], strides = [1, 1]} : vector<4x512xf32> to vector<1x512xf32>
    %c0_21 = arith.constant 0 : index
    %c9 = arith.constant 9 : index
    %c0_22 = arith.constant 0 : index
    %52 = vector.load %arg3[%c0_21, %c9, %c0_22] : memref<1x12x512xf32, #tpu.memory_space<vmem>>, vector<1x3x512xf32>
    %53 = vector.shape_cast %52 : vector<1x3x512xf32> to vector<3x512xf32>
    %54 = vector.broadcast %51 : vector<1x512xf32> to vector<3x512xf32>
    %55 = arith.mulf %54, %53 : vector<3x512xf32>
    %56 = arith.addf %50, %55 : vector<3x512xf32>
    %c0_23 = arith.constant 0 : index
    %c0_24 = arith.constant 0 : index
    %c0_25 = arith.constant 0 : index
    %57 = vector.load %arg10[%c0_23, %c0_24, %c0_25] : memref<1x3x512xf32, #tpu.memory_space<vmem>>, vector<1x3x512xf32>
    %58 = vector.shape_cast %57 : vector<1x3x512xf32> to vector<3x512xf32>
    %59 = vector.shape_cast %56 : vector<3x512xf32> to vector<1x3x512xf32>
    tpu.vector_store %arg10[%c0_23, %c0_24, %c0_25], %59 {strides = array<i32>} : memref<1x3x512xf32, #tpu.memory_space<vmem>>, vector<1x3x512xf32>,
    %c0_26 = arith.constant 0 : index
    %c0_27 = arith.constant 0 : index
    %c0_28 = arith.constant 0 : index
    %60 = vector.load %arg4[%c0_26, %c0_27, %c0_28] : memref<1x4x512xf32, #tpu.memory_space<vmem>>, vector<1x4x512xf32>
    %61 = vector.shape_cast %60 : vector<1x4x512xf32> to vector<4x512xf32>
    %62 = arith.mulf %21, %61 : vector<4x512xf32>
    %cst_29 = arith.constant dense<0.000000e+00> : vector<512xf32>
    %63 = vector.multi_reduction <add>, %62, %cst_29 [0] : vector<4x512xf32> to vector<512xf32>
    %64 = vector.shape_cast %63 : vector<512xf32> to vector<1x512xf32>
    %c0_30 = arith.constant 0 : index
    %c0_31 = arith.constant 0 : index
    %c0_32 = arith.constant 0 : index
    %65 = vector.load %arg7[%c0_30, %c0_31, %c0_32] : memref<1x1x512xf32, #tpu.memory_space<vmem>>, vector<1x1x512xf32>
    %66 = vector.shape_cast %65 : vector<1x1x512xf32> to vector<1x512xf32>
    %67 = arith.mulf %22, %66 : vector<1x512xf32>
    %68 = arith.addf %64, %67 : vector<1x512xf32>
    %c0_33 = arith.constant 0 : index
    %c0_34 = arith.constant 0 : index
    %c0_35 = arith.constant 0 : index
    %69 = vector.load %arg11[%c0_33, %c0_34, %c0_35] : memref<1x1x512xf32, #tpu.memory_space<vmem>>, vector<1x1x512xf32>
    %70 = vector.shape_cast %69 : vector<1x1x512xf32> to vector<1x512xf32>
    %71 = vector.shape_cast %68 : vector<1x512xf32> to vector<1x1x512xf32>
    tpu.vector_store %arg11[%c0_33, %c0_34, %c0_35], %71 {strides = array<i32>} : memref<1x1x512xf32, #tpu.memory_space<vmem>>, vector<1x1x512xf32>,
    %c0_36 = arith.constant 0 : index
    %c0_37 = arith.constant 0 : index
    %c0_38 = arith.constant 0 : index
    %72 = vector.load %arg5[%c0_36, %c0_37, %c0_38] : memref<1x4x512xf32, #tpu.memory_space<vmem>>, vector<1x4x512xf32>
    %73 = vector.shape_cast %72 : vector<1x4x512xf32> to vector<4x512xf32>
    %cst_39 = arith.constant 1.000000e+00 : f32
    %74 = vector.broadcast %cst_39 : f32 to vector<4x512xf32>
    %75 = arith.subf %73, %74 : vector<4x512xf32>
    %76 = math.absf %75 : vector<4x512xf32>
    %cst_40 = arith.constant 0.000000e+00 : f32
    %77 = vector.broadcast %cst_40 : f32 to vector<4x512xf32>
    %78 = arith.subf %77, %76 : vector<4x512xf32>
    %79 = math.exp %78 : vector<4x512xf32>
    %cst_41 = arith.constant 1.000000e+00 : f32
    %80 = vector.broadcast %cst_41 : f32 to vector<4x512xf32>
    %81 = arith.addf %80, %79 : vector<4x512xf32>
    %82 = tpu.reciprocal %81 {approx = true} : vector<4x512xf32> -> vector<4x512xf32>
    %83 = arith.mulf %81, %82 : vector<4x512xf32>
    %cst_42 = arith.constant 2.000000e+00 : f32
    %84 = vector.broadcast %cst_42 : f32 to vector<4x512xf32>
    %85 = arith.subf %84, %83 : vector<4x512xf32>
    %86 = arith.mulf %82, %85 : vector<4x512xf32>
    %cst_43 = arith.constant 0.000000e+00 : f32
    %87 = vector.broadcast %cst_43 : f32 to vector<4x512xf32>
    %88 = arith.cmpf oge, %75, %87 : vector<4x512xf32>
    %89 = arith.mulf %79, %86 : vector<4x512xf32>
    %90 = arith.select %88, %86, %89 : vector<4x512xi1>, vector<4x512xf32>
    %c0_44 = arith.constant 0 : index
    %c0_45 = arith.constant 0 : index
    %c0_46 = arith.constant 0 : index
    %91 = vector.load %arg12[%c0_44, %c0_45, %c0_46] : memref<1x4x512xf32, #tpu.memory_space<vmem>>, vector<1x4x512xf32>
    %92 = vector.shape_cast %91 : vector<1x4x512xf32> to vector<4x512xf32>
    %93 = vector.shape_cast %90 : vector<4x512xf32> to vector<1x4x512xf32>
    tpu.vector_store %arg12[%c0_44, %c0_45, %c0_46], %93 {strides = array<i32>} : memref<1x4x512xf32, #tpu.memory_space<vmem>>, vector<1x4x512xf32>,
    %94 = arith.mulf %13, %19 : vector<1x512xf32>
    %c0_47 = arith.constant 0 : index
    %c0_48 = arith.constant 0 : index
    %c0_49 = arith.constant 0 : index
    %95 = vector.load %arg8[%c0_47, %c0_48, %c0_49] : memref<1x1x512xf32, #tpu.memory_space<vmem>>, vector<1x1x512xf32>
    %96 = vector.shape_cast %95 : vector<1x1x512xf32> to vector<1x512xf32>
    %97 = arith.subf %96, %94 : vector<1x512xf32>
    %cst_50 = arith.constant 0.000000e+00 : f32
    %98 = vector.broadcast %cst_50 : f32 to vector<1x512xf32>
    %99 = arith.maximumf %97, %98 : vector<1x512xf32>
    %c0_51 = arith.constant 0 : index
    %c0_52 = arith.constant 0 : index
    %c0_53 = arith.constant 0 : index
    %100 = vector.load %arg13[%c0_51, %c0_52, %c0_53] : memref<1x1x512xf32, #tpu.memory_space<vmem>>, vector<1x1x512xf32>
    %101 = vector.shape_cast %100 : vector<1x1x512xf32> to vector<1x512xf32>
    %102 = vector.shape_cast %99 : vector<1x512xf32> to vector<1x1x512xf32>
    tpu.vector_store %arg13[%c0_51, %c0_52, %c0_53], %102 {strides = array<i32>} : memref<1x1x512xf32, #tpu.memory_space<vmem>>, vector<1x1x512xf32>,
    %c0_54 = arith.constant 0 : index
    %c0_55 = arith.constant 0 : index
    %c0_56 = arith.constant 0 : index
    %103 = vector.load %arg3[%c0_54, %c0_55, %c0_56] : memref<1x12x512xf32, #tpu.memory_space<vmem>>, vector<1x12x512xf32>
    %104 = vector.shape_cast %103 : vector<1x12x512xf32> to vector<12x512xf32>
    %c0_57 = arith.constant 0 : index
    %c0_58 = arith.constant 0 : index
    %c0_59 = arith.constant 0 : index
    %105 = vector.load %arg14[%c0_57, %c0_58, %c0_59] : memref<1x15x512xf32, #tpu.memory_space<vmem>>, vector<1x12x512xf32>
    %106 = vector.shape_cast %105 : vector<1x12x512xf32> to vector<12x512xf32>
    %107 = vector.shape_cast %104 : vector<12x512xf32> to vector<1x12x512xf32>
    tpu.vector_store %arg14[%c0_57, %c0_58, %c0_59], %107 {strides = array<i32>} : memref<1x15x512xf32, #tpu.memory_space<vmem>>, vector<1x12x512xf32>,
    %c0_60 = arith.constant 0 : index
    %c0_61 = arith.constant 0 : index
    %c0_62 = arith.constant 0 : index
    %108 = vector.load %arg6[%c0_60, %c0_61, %c0_62] : memref<1x3x512xf32, #tpu.memory_space<vmem>>, vector<1x3x512xf32>
    %109 = vector.shape_cast %108 : vector<1x3x512xf32> to vector<3x512xf32>
    %c0_63 = arith.constant 0 : index
    %c12 = arith.constant 12 : index
    %c0_64 = arith.constant 0 : index
    %110 = vector.load %arg14[%c0_63, %c12, %c0_64] : memref<1x15x512xf32, #tpu.memory_space<vmem>>, vector<1x3x512xf32>
    %111 = vector.shape_cast %110 : vector<1x3x512xf32> to vector<3x512xf32>
    %112 = vector.shape_cast %109 : vector<3x512xf32> to vector<1x3x512xf32>
    tpu.vector_store %arg14[%c0_63, %c12, %c0_64], %112 {strides = array<i32>} : memref<1x15x512xf32, #tpu.memory_space<vmem>>, vector<1x3x512xf32>,
    %c0_65 = arith.constant 0 : index
    %c0_66 = arith.constant 0 : index
    %c0_67 = arith.constant 0 : index
    %113 = vector.load %arg4[%c0_65, %c0_66, %c0_67] : memref<1x4x512xf32, #tpu.memory_space<vmem>>, vector<1x4x512xf32>
    %114 = vector.shape_cast %113 : vector<1x4x512xf32> to vector<4x512xf32>
    %c0_68 = arith.constant 0 : index
    %c0_69 = arith.constant 0 : index
    %c0_70 = arith.constant 0 : index
    %115 = vector.load %arg15[%c0_68, %c0_69, %c0_70] : memref<1x5x512xf32, #tpu.memory_space<vmem>>, vector<1x4x512xf32>
    %116 = vector.shape_cast %115 : vector<1x4x512xf32> to vector<4x512xf32>
    %117 = vector.shape_cast %114 : vector<4x512xf32> to vector<1x4x512xf32>
    tpu.vector_store %arg15[%c0_68, %c0_69, %c0_70], %117 {strides = array<i32>} : memref<1x5x512xf32, #tpu.memory_space<vmem>>, vector<1x4x512xf32>,
    %c0_71 = arith.constant 0 : index
    %c0_72 = arith.constant 0 : index
    %c0_73 = arith.constant 0 : index
    %118 = vector.load %arg7[%c0_71, %c0_72, %c0_73] : memref<1x1x512xf32, #tpu.memory_space<vmem>>, vector<1x1x512xf32>
    %119 = vector.shape_cast %118 : vector<1x1x512xf32> to vector<1x512xf32>
    %c0_74 = arith.constant 0 : index
    %c4_75 = arith.constant 4 : index
    %c0_76 = arith.constant 0 : index
    %120 = vector.load %arg15[%c0_74, %c4_75, %c0_76] : memref<1x5x512xf32, #tpu.memory_space<vmem>>, vector<1x1x512xf32>
    %121 = vector.shape_cast %120 : vector<1x1x512xf32> to vector<1x512xf32>
    %122 = vector.shape_cast %119 : vector<1x512xf32> to vector<1x1x512xf32>
    tpu.vector_store %arg15[%c0_74, %c4_75, %c0_76], %122 {strides = array<i32>} : memref<1x5x512xf32, #tpu.memory_space<vmem>>, vector<1x1x512xf32>,
    %cst_77 = arith.constant 8.000000e-01 : f32
    %123 = vector.broadcast %cst_77 : f32 to vector<1x512xf32>
    %124 = arith.mulf %123, %14 : vector<1x512xf32>
    %125 = vector.broadcast %124 : vector<1x512xf32> to vector<4x512xf32>
    %126 = arith.cmpf ogt, %8, %125 : vector<4x512xf32>
    %127 = arith.extui %126 : vector<4x512xi1> to vector<4x512xi32>
    %128 = arith.sitofp %127 : vector<4x512xi32> to vector<4x512xf32>
    %cst_78 = arith.constant dense<0.000000e+00> : vector<4xf32>
    %129 = vector.multi_reduction <add>, %128, %cst_78 [1] : vector<4x512xf32> to vector<4xf32>
    %130 = vector.shape_cast %129 : vector<4xf32> to vector<4x1xf32>
    %c0_79 = arith.constant 0 : index
    %c0_80 = arith.constant 0 : index
    %c0_81 = arith.constant 0 : index
    %131 = vector.load %arg16[%c0_79, %c0_80, %c0_81] : memref<1x4x1xf32, #tpu.memory_space<vmem>>, vector<1x4x1xf32>
    %132 = vector.shape_cast %131 : vector<1x4x1xf32> to vector<4x1xf32>
    %133 = vector.shape_cast %130 : vector<4x1xf32> to vector<1x4x1xf32>
    tpu.vector_store %arg16[%c0_79, %c0_80, %c0_81], %133 {strides = array<i32>} : memref<1x4x1xf32, #tpu.memory_space<vmem>>, vector<1x4x1xf32>,
    %cst_82 = arith.constant 2.38629436 : f32
    %134 = vector.broadcast %cst_82 : f32 to vector<4x512xf32>
    %135 = arith.cmpf ogt, %73, %134 : vector<4x512xf32>
    %136 = arith.extui %135 : vector<4x512xi1> to vector<4x512xi32>
    %137 = arith.sitofp %136 : vector<4x512xi32> to vector<4x512xf32>
    %cst_83 = arith.constant dense<0.000000e+00> : vector<4xf32>
    %138 = vector.multi_reduction <add>, %137, %cst_83 [1] : vector<4x512xf32> to vector<4xf32>
    %139 = vector.shape_cast %138 : vector<4xf32> to vector<4x1xf32>
    %c0_84 = arith.constant 0 : index
    %c0_85 = arith.constant 0 : index
    %c0_86 = arith.constant 0 : index
    %140 = vector.load %arg17[%c0_84, %c0_85, %c0_86] : memref<1x4x1xf32, #tpu.memory_space<vmem>>, vector<1x4x1xf32>
    %141 = vector.shape_cast %140 : vector<1x4x1xf32> to vector<4x1xf32>
    %142 = vector.shape_cast %139 : vector<4x1xf32> to vector<1x4x1xf32>
    tpu.vector_store %arg17[%c0_84, %c0_85, %c0_86], %142 {strides = array<i32>} : memref<1x4x1xf32, #tpu.memory_space<vmem>>, vector<1x4x1xf32>,
    return
  }
  func.func @transform_0(%arg0: i32, %arg1: i32) -> (i32, i32, i32) {
    %c0_i32 = arith.constant 0 : i32
    %c0_i32_0 = arith.constant 0 : i32
    return %arg0, %c0_i32, %arg1 : i32, i32, i32
  }
  func.func @transform_1(%arg0: i32, %arg1: i32) -> (i32, i32, i32) {
    %c0_i32 = arith.constant 0 : i32
    %c0_i32_0 = arith.constant 0 : i32
    return %arg0, %c0_i32, %arg1 : i32, i32, i32
  }
  func.func @transform_2(%arg0: i32, %arg1: i32) -> (i32, i32, i32) {
    %c0_i32 = arith.constant 0 : i32
    %c0_i32_0 = arith.constant 0 : i32
    return %arg0, %c0_i32, %arg1 : i32, i32, i32
  }
  func.func @transform_3(%arg0: i32, %arg1: i32) -> (i32, i32, i32) {
    %c0_i32 = arith.constant 0 : i32
    %c0_i32_0 = arith.constant 0 : i32
    return %arg0, %c0_i32, %arg1 : i32, i32, i32
  }
  func.func @transform_4(%arg0: i32, %arg1: i32) -> (i32, i32, i32) {
    %c0_i32 = arith.constant 0 : i32
    %c0_i32_0 = arith.constant 0 : i32
    return %arg0, %c0_i32, %arg1 : i32, i32, i32
  }
  func.func @transform_5(%arg0: i32, %arg1: i32) -> (i32, i32, i32) {
    %c0_i32 = arith.constant 0 : i32
    %c0_i32_0 = arith.constant 0 : i32
    return %arg0, %c0_i32, %arg1 : i32, i32, i32
  }
  func.func @transform_6(%arg0: i32, %arg1: i32) -> (i32, i32, i32) {
    %c0_i32 = arith.constant 0 : i32
    %c0_i32_0 = arith.constant 0 : i32
    return %arg0, %c0_i32, %arg1 : i32, i32, i32
  }
  func.func @transform_7(%arg0: i32, %arg1: i32) -> (i32, i32, i32) {
    %c0_i32 = arith.constant 0 : i32
    %c0_i32_0 = arith.constant 0 : i32
    return %arg0, %c0_i32, %arg1 : i32, i32, i32
  }
  func.func @transform_8(%arg0: i32, %arg1: i32) -> (i32, i32, i32) {
    %c0_i32 = arith.constant 0 : i32
    %c0_i32_0 = arith.constant 0 : i32
    return %arg0, %c0_i32, %arg1 : i32, i32, i32
  }
  func.func @transform_9(%arg0: i32, %arg1: i32) -> (i32, i32, i32) {
    %c0_i32 = arith.constant 0 : i32
    %c0_i32_0 = arith.constant 0 : i32
    return %arg0, %c0_i32, %arg1 : i32, i32, i32
  }
  func.func @transform_10(%arg0: i32, %arg1: i32) -> (i32, i32, i32) {
    %c0_i32 = arith.constant 0 : i32
    %c0_i32_0 = arith.constant 0 : i32
    return %arg0, %c0_i32, %arg1 : i32, i32, i32
  }
  func.func @transform_11(%arg0: i32, %arg1: i32) -> (i32, i32, i32) {
    %c0_i32 = arith.constant 0 : i32
    %c0_i32_0 = arith.constant 0 : i32
    return %arg0, %c0_i32, %arg1 : i32, i32, i32
  }
  func.func @transform_12(%arg0: i32, %arg1: i32) -> (i32, i32, i32) {
    %c0_i32 = arith.constant 0 : i32
    %c0_i32_0 = arith.constant 0 : i32
    return %arg0, %c0_i32, %arg1 : i32, i32, i32
  }
  func.func @transform_13(%arg0: i32, %arg1: i32) -> (i32, i32, i32) {
    %c0_i32 = arith.constant 0 : i32
    %c0_i32_0 = arith.constant 0 : i32
    return %arg0, %c0_i32, %arg1 : i32, i32, i32
  }
  func.func @transform_14(%arg0: i32, %arg1: i32) -> (i32, i32, i32) {
    %c2_i32 = arith.constant 2 : i32
    %0 = arith.muli %arg0, %c2_i32 : i32
    %1 = arith.addi %0, %arg1 : i32
    %c0_i32 = arith.constant 0 : i32
    %c0_i32_0 = arith.constant 0 : i32
    %c0_i32_1 = arith.constant 0 : i32
    return %1, %c0_i32, %c0_i32_0 : i32, i32, i32
  }
  func.func @transform_15(%arg0: i32, %arg1: i32) -> (i32, i32, i32) {
    %c2_i32 = arith.constant 2 : i32
    %0 = arith.muli %arg0, %c2_i32 : i32
    %1 = arith.addi %0, %arg1 : i32
    %c0_i32 = arith.constant 0 : i32
    %c0_i32_0 = arith.constant 0 : i32
    %c0_i32_1 = arith.constant 0 : i32
    return %1, %c0_i32, %c0_i32_0 : i32, i32, i32
  }
}

</mosaic_0001>

<llo_original>
// kernel: tpu_custom_call.1
$region0: #{tpu_custom_call.1}
  #allocation0 [shape = 'u32[]', space=smem, size = 0x4, offset = 0x4, fixed_abs, tag = 'smem constant byte address 0x4 - core index']
  #allocation1 [shape = 'u32[144,128]{1,0:T(1,128)}', space=vmem, size = 0x12000, scoped, tag = 'internal scratch']
  %s0 = inlined_call_operand.vmem [shape: f32[2,4,1024], index: 0, kind: input, shape index: {}]
  %s1 = inlined_call_operand.vmem [shape: f32[2,12,1024], index: 1, kind: input, shape index: {}]
  %s2 = inlined_call_operand.vmem [shape: f32[2,4,1024], index: 2, kind: input, shape index: {}]
  %s3 = inlined_call_operand.vmem [shape: f32[2,4,1024], index: 3, kind: input, shape index: {}]
  %s4 = inlined_call_operand.vmem [shape: f32[2,3,1024], index: 4, kind: input, shape index: {}]
  %s5 = inlined_call_operand.vmem [shape: f32[2,1,1024], index: 5, kind: input, shape index: {}]
  %s6 = inlined_call_operand.vmem [shape: f32[2,1,1024], index: 6, kind: input, shape index: {}]
  %s7 = inlined_call_operand.vmem [shape: f32[2,5,1024], index: 7, kind: output, shape index: {0}]
  %s8 = inlined_call_operand.vmem [shape: f32[2,3,1024], index: 8, kind: output, shape index: {1}]
  %s9 = inlined_call_operand.hbm [shape: f32[2,1,1024], index: 9, kind: output, shape index: {2}]
  %s10 = inlined_call_operand.hbm [shape: f32[2,4,1024], index: 10, kind: output, shape index: {3}]
  %s11 = inlined_call_operand.hbm [shape: f32[2,1,1024], index: 11, kind: output, shape index: {4}]
  %s12 = inlined_call_operand.vmem [shape: f32[2,15,1024], index: 12, kind: output, shape index: {5}]
  %s13 = inlined_call_operand.vmem [shape: f32[2,5,1024], index: 13, kind: output, shape index: {6}]
  %s14 = inlined_call_operand.vmem [shape: f32[4,4,1], index: 14, kind: output, shape index: {7}]
  %s15 = inlined_call_operand.vmem [shape: f32[4,4,1], index: 15, kind: output, shape index: {8}]
  %16 = xla_tuple %s7, %s8, %s9, %s10, %s11, %s12, %s13, %s14, %s15
  %s17 = sld [smem:[#allocation0]]
  $region167: #{tpu_custom_call.1} parent=0
    _
  %s19 = ssub.s32 1, %s17
  %s20 = scalar_select 0, %s19, %s17
  $region1: #{tpu_custom_call.1} parent=0
    #allocation2 [shape = 'u8[65536]{0}', space=vmem, size = 0x10000, scoped, tag = 'input window, operand 1']
    #allocation3 [shape = 'u8[4096]{0}', space=vmem, size = 0x1000, scoped, tag = 'output window, operand 2']
    #allocation4 [shape = 's32[2]{0}', space=sflag, size = 0x8, scoped, tag = 'scoped memory for tpu_custom_call.1']
    #allocation5 [shape = 'u8[16384]{0}', space=vmem, size = 0x4000, scoped, tag = 'output window, operand 3']
    #allocation6 [shape = 's32[2]{0}', space=sflag, size = 0x8, scoped, tag = 'scoped memory for tpu_custom_call.1']
    #allocation7 [shape = 'u8[4096]{0}', space=vmem, size = 0x1000, scoped, tag = 'output window, operand 4']
    #allocation8 [shape = 'u8[65536]{0}', space=vmem, size = 0x10000, scoped, tag = 'output window, operand 5']
    %21 = vsyncpa [#allocation4], 0
    %s22 = scalar_lea.sflag [#allocation4], 1
    %23 = vsyncpa %s22, 0
    %24 = vsyncpa [#allocation6], 0
    %s25 = scalar_lea.sflag [#allocation6], 1
    %26 = vsyncpa %s25, 0
    loop: start=0, step=1, limit=6
    $region2: #{tpu_custom_call.1} parent=1 // loop_pre_header
      _
    $region3: #{tpu_custom_call.1} parent=1 // loop_header
      %s28 = sphi 0, %s32
      %p29 = scmp.ge.s32.totalorder %s28, 6
      %s35 = sphi 0, %s47
      %s36 = sphi 0, %s43
      %s37 = sphi 0, %s35
      %s38 = sphi 0, %s36
      %s39 = sphi 0, %s37
      %s40 = sphi 0, %s38
      %s52 = sphi 0, %s54
      %s55 = sphi 0, %s52
      %s56 = sphi 0, %s55
      %s72 = sphi 0, %s56
      %s80 = sphi 0, %s82
      %s83 = sphi 0, %s80
      %s84 = sphi 0, %s83
      %s100 = sphi 0, %s84
      %s108 = sphi 0, %s110
      %s111 = sphi 0, %s108
      %s112 = sphi 0, %s111
      %s128 = sphi 0, %s112
      %s136 = sphi 0, %s138
      %s139 = sphi 0, %s136
      %s140 = sphi 0, %s139
      %s156 = sphi 0, %s140
      %s164 = sphi 0, %s166
      %s167 = sphi 0, %s164
      %s168 = sphi 0, %s167
      %s184 = sphi 0, %s168
      %s192 = sphi 0, %s194
      %s195 = sphi 0, %s192
      %s196 = sphi 0, %s195
      %s212 = sphi 0, %s196
      %s220 = sphi 0, %s222
      %s223 = sphi 0, %s220
      %s224 = sphi 0, %s223
      %s240 = sphi 0, %s224
      %s248 = sphi 0, %s250
      %s251 = sphi 0, %s248
      %s252 = sphi 0, %s251
      %s268 = sphi 0, %s252
      %s276 = sphi 0, %s278
      %s279 = sphi 0, %s276
      %s280 = sphi 0, %s279
      %s296 = sphi 0, %s280
      %s304 = sphi 0, %s306
      %s307 = sphi 0, %s304
      %s308 = sphi 0, %s307
      %s324 = sphi 0, %s308
      %s332 = sphi 0, %s334
      %s335 = sphi 0, %s332
      %s336 = sphi 0, %s335
      %s352 = sphi 0, %s336
      %s360 = sphi 0, %s362
      %s363 = sphi 0, %s360
      %s364 = sphi 0, %s363
      %s380 = sphi 0, %s364
      %s388 = sphi 0, %s390
      %s391 = sphi 0, %s388
      %s392 = sphi 0, %s391
      %s408 = sphi 0, %s392
      %s416 = sphi 0, %s418
      %s419 = sphi 0, %s416
      %s420 = sphi 0, %s419
      %s436 = sphi 0, %s420
      %s446 = sphi 0, %s448
      %s449 = sphi 0, %s446
      %s450 = sphi 0, %s449
      %s466 = sphi 0, %s450
      %s476 = sphi 0, %s478
      %s479 = sphi 0, %s476
      %s480 = sphi 0, %s479
      %s496 = sphi 0, %s480
    $region4: #{tpu_custom_call.1} parent=1 // loop_header_branch
      %31 = sbr.rel (%p29) target = $region8
    $region5: #{tpu_custom_call.1} parent=1 // loop_body
      %s33 = ssub.s32 %s28, 1
      %s34 = ssub.s32 %s28, 2
      %s41 = sadd.s32 1, %s36
      %p42 = scmp.ge.s32.totalorder %s41, 2
      %s43 = scalar_select %p42, 0, %s41
      %s44 = sadd.s32 1, %s35
      %s45 = scalar_select %p42, %s44, %s35
      %p46 = scmp.ge.s32.totalorder %s45, 2
      %s47 = scalar_select %p46, 0, %s45
      %s48 = ssub.s32 %s35, %s47
      %s49 = ssub.s32 %s36, %s43
      %s50 = sor.u32 %s48, %s49
      %p51 = scmp.eq.s32.totalorder %s50, 0
      %s53 = sadd.s32 %s52, 1
      %s54 = scalar_select %p51, %s52, %s53
      %p57 = pneg %p51
      %p58 = scmp.eq.s32.totalorder %s28, 3
      %p59 = por %p57, %p58
      %p60 = scmp.ne.s32.totalorder %s52, %s55
      %p61 = scmp.eq.s32.totalorder %s28, 0
      %p62 = por %p60, %p61
      %p63 = scmp.ne.s32.totalorder %s52, %s55
      %p64 = scmp.eq.s32.totalorder %s33, 3
      %p65 = por %p63, %p64
      %p66 = scmp.ne.s32.totalorder %s55, %s56
      %p67 = scmp.eq.s32.totalorder %s33, 0
      %p68 = por %p66, %p67
      %p69 = scmp.ne.s32.totalorder %s55, %s56
      %p70 = scmp.eq.s32.totalorder %s34, 3
      %p71 = por %p69, %p70
      %p73 = scmp.ne.s32.totalorder %s56, %s72
      %p74 = scmp.eq.s32.totalorder %s34, 0
      %p75 = por %p73, %p74
      %s76 = ssub.s32 %s35, %s47
      %s77 = ssub.s32 %s36, %s43
      %s78 = sor.u32 %s76, %s77
      %p79 = scmp.eq.s32.totalorder %s78, 0
      %s81 = sadd.s32 %s80, 1
      %s82 = scalar_select %p79, %s80, %s81
      %p85 = pneg %p79
      %p86 = scmp.eq.s32.totalorder %s28, 3
      %p87 = por %p85, %p86
      %p88 = scmp.ne.s32.totalorder %s80, %s83
      %p89 = scmp.eq.s32.totalorder %s28, 0
      %p90 = por %p88, %p89
      %p91 = scmp.ne.s32.totalorder %s80, %s83
      %p92 = scmp.eq.s32.totalorder %s33, 3
      %p93 = por %p91, %p92
      %p94 = scmp.ne.s32.totalorder %s83, %s84
      %p95 = scmp.eq.s32.totalorder %s33, 0
      %p96 = por %p94, %p95
      %p97 = scmp.ne.s32.totalorder %s83, %s84
      %p98 = scmp.eq.s32.totalorder %s34, 3
      %p99 = por %p97, %p98
      %p101 = scmp.ne.s32.totalorder %s84, %s100
      %p102 = scmp.eq.s32.totalorder %s34, 0
      %p103 = por %p101, %p102
      %s104 = ssub.s32 %s35, %s47
      %s105 = ssub.s32 %s36, %s43
      %s106 = sor.u32 %s104, %s105
      %p107 = scmp.eq.s32.totalorder %s106, 0
      %s109 = sadd.s32 %s108, 1
      %s110 = scalar_select %p107, %s108, %s109
      %p113 = pneg %p107
      %p114 = scmp.eq.s32.totalorder %s28, 3
      %p115 = por %p113, %p114
      %p116 = scmp.ne.s32.totalorder %s108, %s111
      %p117 = scmp.eq.s32.totalorder %s28, 0
      %p118 = por %p116, %p117
      %p119 = scmp.ne.s32.totalorder %s108, %s111
      %p120 = scmp.eq.s32.totalorder %s33, 3
      %p121 = por %p119, %p120
      %p122 = scmp.ne.s32.totalorder %s111, %s112
      %p123 = scmp.eq.s32.totalorder %s33, 0
      %p124 = por %p122, %p123
      %p125 = scmp.ne.s32.totalorder %s111, %s112
      %p126 = scmp.eq.s32.totalorder %s34, 3
      %p127 = por %p125, %p126
      %p129 = scmp.ne.s32.totalorder %s112, %s128
      %p130 = scmp.eq.s32.totalorder %s34, 0
      %p131 = por %p129, %p130
      %s132 = ssub.s32 %s35, %s47
      %s133 = ssub.s32 %s36, %s43
      %s134 = sor.u32 %s132, %s133
      %p135 = scmp.eq.s32.totalorder %s134, 0
      %s137 = sadd.s32 %s136, 1
      %s138 = scalar_select %p135, %s136, %s137
      %p141 = pneg %p135
      %p142 = scmp.eq.s32.totalorder %s28, 3
      %p143 = por %p141, %p142
      %p144 = scmp.ne.s32.totalorder %s136, %s139
      %p145 = scmp.eq.s32.totalorder %s28, 0
      %p146 = por %p144, %p145
      %p147 = scmp.ne.s32.totalorder %s136, %s139
      %p148 = scmp.eq.s32.totalorder %s33, 3
      %p149 = por %p147, %p148
      %p150 = scmp.ne.s32.totalorder %s139, %s140
      %p151 = scmp.eq.s32.totalorder %s33, 0
      %p152 = por %p150, %p151
      %p153 = scmp.ne.s32.totalorder %s139, %s140
      %p154 = scmp.eq.s32.totalorder %s34, 3
      %p155 = por %p153, %p154
      %p157 = scmp.ne.s32.totalorder %s140, %s156
      %p158 = scmp.eq.s32.totalorder %s34, 0
      %p159 = por %p157, %p158
      %s160 = ssub.s32 %s35, %s47
      %s161 = ssub.s32 %s36, %s43
      %s162 = sor.u32 %s160, %s161
      %p163 = scmp.eq.s32.totalorder %s162, 0
      %s165 = sadd.s32 %s164, 1
      %s166 = scalar_select %p163, %s164, %s165
      %p169 = pneg %p163
      %p170 = scmp.eq.s32.totalorder %s28, 3
      %p171 = por %p169, %p170
      %p172 = scmp.ne.s32.totalorder %s164, %s167
      %p173 = scmp.eq.s32.totalorder %s28, 0
      %p174 = por %p172, %p173
      %p175 = scmp.ne.s32.totalorder %s164, %s167
      %p176 = scmp.eq.s32.totalorder %s33, 3
      %p177 = por %p175, %p176
      %p178 = scmp.ne.s32.totalorder %s167, %s168
      %p179 = scmp.eq.s32.totalorder %s33, 0
      %p180 = por %p178, %p179
      %p181 = scmp.ne.s32.totalorder %s167, %s168
      %p182 = scmp.eq.s32.totalorder %s34, 3
      %p183 = por %p181, %p182
      %p185 = scmp.ne.s32.totalorder %s168, %s184
      %p186 = scmp.eq.s32.totalorder %s34, 0
      %p187 = por %p185, %p186
      %s188 = ssub.s32 %s35, %s47
      %s189 = ssub.s32 %s36, %s43
      %s190 = sor.u32 %s188, %s189
      %p191 = scmp.eq.s32.totalorder %s190, 0
      %s193 = sadd.s32 %s192, 1
      %s194 = scalar_select %p191, %s192, %s193
      %p197 = pneg %p191
      %p198 = scmp.eq.s32.totalorder %s28, 3
      %p199 = por %p197, %p198
      %p200 = scmp.ne.s32.totalorder %s192, %s195
      %p201 = scmp.eq.s32.totalorder %s28, 0
      %p202 = por %p200, %p201
      %p203 = scmp.ne.s32.totalorder %s192, %s195
      %p204 = scmp.eq.s32.totalorder %s33, 3
      %p205 = por %p203, %p204
      %p206 = scmp.ne.s32.totalorder %s195, %s196
      %p207 = scmp.eq.s32.totalorder %s33, 0
      %p208 = por %p206, %p207
      %p209 = scmp.ne.s32.totalorder %s195, %s196
      %p210 = scmp.eq.s32.totalorder %s34, 3
      %p211 = por %p209, %p210
      %p213 = scmp.ne.s32.totalorder %s196, %s212
      %p214 = scmp.eq.s32.totalorder %s34, 0
      %p215 = por %p213, %p214
      %s216 = ssub.s32 %s35, %s47
      %s217 = ssub.s32 %s36, %s43
      %s218 = sor.u32 %s216, %s217
      %p219 = scmp.eq.s32.totalorder %s218, 0
      %s221 = sadd.s32 %s220, 1
      %s222 = scalar_select %p219, %s220, %s221
      %p225 = pneg %p219
      %p226 = scmp.eq.s32.totalorder %s28, 3
      %p227 = por %p225, %p226
      %p228 = scmp.ne.s32.totalorder %s220, %s223
      %p229 = scmp.eq.s32.totalorder %s28, 0
      %p230 = por %p228, %p229
      %p231 = scmp.ne.s32.totalorder %s220, %s223
      %p232 = scmp.eq.s32.totalorder %s33, 3
      %p233 = por %p231, %p232
      %p234 = scmp.ne.s32.totalorder %s223, %s224
      %p235 = scmp.eq.s32.totalorder %s33, 0
      %p236 = por %p234, %p235
      %p237 = scmp.ne.s32.totalorder %s223, %s224
      %p238 = scmp.eq.s32.totalorder %s34, 3
      %p239 = por %p237, %p238
      %p241 = scmp.ne.s32.totalorder %s224, %s240
      %p242 = scmp.eq.s32.totalorder %s34, 0
      %p243 = por %p241, %p242
      %s244 = ssub.s32 %s35, %s47
      %s245 = ssub.s32 %s36, %s43
      %s246 = sor.u32 %s244, %s245
      %p247 = scmp.eq.s32.totalorder %s246, 0
      %s249 = sadd.s32 %s248, 1
      %s250 = scalar_select %p247, %s248, %s249
      %p253 = pneg %p247
      %p254 = scmp.eq.s32.totalorder %s28, 3
      %p255 = por %p253, %p254
      %p256 = scmp.ne.s32.totalorder %s248, %s251
      %p257 = scmp.eq.s32.totalorder %s28, 0
      %p258 = por %p256, %p257
      %p259 = scmp.ne.s32.totalorder %s248, %s251
      %p260 = scmp.eq.s32.totalorder %s33, 3
      %p261 = por %p259, %p260
      %p262 = scmp.ne.s32.totalorder %s251, %s252
      %p263 = scmp.eq.s32.totalorder %s33, 0
      %p264 = por %p262, %p263
      %p265 = scmp.ne.s32.totalorder %s251, %s252
      %p266 = scmp.eq.s32.totalorder %s34, 3
      %p267 = por %p265, %p266
      %p269 = scmp.ne.s32.totalorder %s252, %s268
      %p270 = scmp.eq.s32.totalorder %s34, 0
      %p271 = por %p269, %p270
      %s272 = ssub.s32 %s35, %s47
      %s273 = ssub.s32 %s36, %s43
      %s274 = sor.u32 %s272, %s273
      %p275 = scmp.eq.s32.totalorder %s274, 0
      %s277 = sadd.s32 %s276, 1
      %s278 = scalar_select %p275, %s276, %s277
      %p281 = pneg %p275
      %p282 = scmp.eq.s32.totalorder %s28, 3
      %p283 = por %p281, %p282
      %p284 = scmp.ne.s32.totalorder %s276, %s279
      %p285 = scmp.eq.s32.totalorder %s28, 0
      %p286 = por %p284, %p285
      %p287 = scmp.ne.s32.totalorder %s276, %s279
      %p288 = scmp.eq.s32.totalorder %s33, 3
      %p289 = por %p287, %p288
      %p290 = scmp.ne.s32.totalorder %s279, %s280
      %p291 = scmp.eq.s32.totalorder %s33, 0
      %p292 = por %p290, %p291
      %p293 = scmp.ne.s32.totalorder %s279, %s280
      %p294 = scmp.eq.s32.totalorder %s34, 3
      %p295 = por %p293, %p294
      %p297 = scmp.ne.s32.totalorder %s280, %s296
      %p298 = scmp.eq.s32.totalorder %s34, 0
      %p299 = por %p297, %p298
      %s300 = ssub.s32 %s35, %s47
      %s301 = ssub.s32 %s36, %s43
      %s302 = sor.u32 %s300, %s301
      %p303 = scmp.eq.s32.totalorder %s302, 0
      %s305 = sadd.s32 %s304, 1
      %s306 = scalar_select %p303, %s304, %s305
      %p309 = pneg %p303
      %p310 = scmp.eq.s32.totalorder %s28, 3
      %p311 = por %p309, %p310
      %p312 = scmp.ne.s32.totalorder %s304, %s307
      %p313 = scmp.eq.s32.totalorder %s28, 0
      %p314 = por %p312, %p313
      %p315 = scmp.ne.s32.totalorder %s304, %s307
      %p316 = scmp.eq.s32.totalorder %s33, 3
      %p317 = por %p315, %p316
      %p318 = scmp.ne.s32.totalorder %s307, %s308
      %p319 = scmp.eq.s32.totalorder %s33, 0
      %p320 = por %p318, %p319
      %p321 = scmp.ne.s32.totalorder %s307, %s308
      %p322 = scmp.eq.s32.totalorder %s34, 3
      %p323 = por %p321, %p322
      %p325 = scmp.ne.s32.totalorder %s308, %s324
      %p326 = scmp.eq.s32.totalorder %s34, 0
      %p327 = por %p325, %p326
      %s328 = ssub.s32 %s35, %s47
      %s329 = ssub.s32 %s36, %s43
      %s330 = sor.u32 %s328, %s329
      %p331 = scmp.eq.s32.totalorder %s330, 0
      %s333 = sadd.s32 %s332, 1
      %s334 = scalar_select %p331, %s332, %s333
      %p337 = pneg %p331
      %p338 = scmp.eq.s32.totalorder %s28, 3
      %p339 = por %p337, %p338
      %p340 = scmp.ne.s32.totalorder %s332, %s335
      %p341 = scmp.eq.s32.totalorder %s28, 0
      %p342 = por %p340, %p341
      %p343 = scmp.ne.s32.totalorder %s332, %s335
      %p344 = scmp.eq.s32.totalorder %s33, 3
      %p345 = por %p343, %p344
      %p346 = scmp.ne.s32.totalorder %s335, %s336
      %p347 = scmp.eq.s32.totalorder %s33, 0
      %p348 = por %p346, %p347
      %p349 = scmp.ne.s32.totalorder %s335, %s336
      %p350 = scmp.eq.s32.totalorder %s34, 3
      %p351 = por %p349, %p350
      %p353 = scmp.ne.s32.totalorder %s336, %s352
      %p354 = scmp.eq.s32.totalorder %s34, 0
      %p355 = por %p353, %p354
      %s356 = ssub.s32 %s35, %s47
      %s357 = ssub.s32 %s36, %s43
      %s358 = sor.u32 %s356, %s357
      %p359 = scmp.eq.s32.totalorder %s358, 0
      %s361 = sadd.s32 %s360, 1
      %s362 = scalar_select %p359, %s360, %s361
      %p365 = pneg %p359
      %p366 = scmp.eq.s32.totalorder %s28, 3
      %p367 = por %p365, %p366
      %p368 = scmp.ne.s32.totalorder %s360, %s363
      %p369 = scmp.eq.s32.totalorder %s28, 0
      %p370 = por %p368, %p369
      %p371 = scmp.ne.s32.totalorder %s360, %s363
      %p372 = scmp.eq.s32.totalorder %s33, 3
      %p373 = por %p371, %p372
      %p374 = scmp.ne.s32.totalorder %s363, %s364
      %p375 = scmp.eq.s32.totalorder %s33, 0
      %p376 = por %p374, %p375
      %p377 = scmp.ne.s32.totalorder %s363, %s364
      %p378 = scmp.eq.s32.totalorder %s34, 3
      %p379 = por %p377, %p378
      %p381 = scmp.ne.s32.totalorder %s364, %s380
      %p382 = scmp.eq.s32.totalorder %s34, 0
      %p383 = por %p381, %p382
      %s384 = ssub.s32 %s35, %s47
      %s385 = ssub.s32 %s36, %s43
      %s386 = sor.u32 %s384, %s385
      %p387 = scmp.eq.s32.totalorder %s386, 0
      %s389 = sadd.s32 %s388, 1
      %s390 = scalar_select %p387, %s388, %s389
      %p393 = pneg %p387
      %p394 = scmp.eq.s32.totalorder %s28, 3
      %p395 = por %p393, %p394
      %p396 = scmp.ne.s32.totalorder %s388, %s391
      %p397 = scmp.eq.s32.totalorder %s28, 0
      %p398 = por %p396, %p397
      %p399 = scmp.ne.s32.totalorder %s388, %s391
      %p400 = scmp.eq.s32.totalorder %s33, 3
      %p401 = por %p399, %p400
      %p402 = scmp.ne.s32.totalorder %s391, %s392
      %p403 = scmp.eq.s32.totalorder %s33, 0
      %p404 = por %p402, %p403
      %p405 = scmp.ne.s32.totalorder %s391, %s392
      %p406 = scmp.eq.s32.totalorder %s34, 3
      %p407 = por %p405, %p406
      %p409 = scmp.ne.s32.totalorder %s392, %s408
      %p410 = scmp.eq.s32.totalorder %s34, 0
      %p411 = por %p409, %p410
      %s412 = ssub.s32 %s35, %s47
      %s413 = ssub.s32 %s36, %s43
      %s414 = sor.u32 %s412, %s413
      %p415 = scmp.eq.s32.totalorder %s414, 0
      %s417 = sadd.s32 %s416, 1
      %s418 = scalar_select %p415, %s416, %s417
      %p421 = pneg %p415
      %p422 = scmp.eq.s32.totalorder %s28, 3
      %p423 = por %p421, %p422
      %p424 = scmp.ne.s32.totalorder %s416, %s419
      %p425 = scmp.eq.s32.totalorder %s28, 0
      %p426 = por %p424, %p425
      %p427 = scmp.ne.s32.totalorder %s416, %s419
      %p428 = scmp.eq.s32.totalorder %s33, 3
      %p429 = por %p427, %p428
      %p430 = scmp.ne.s32.totalorder %s419, %s420
      %p431 = scmp.eq.s32.totalorder %s33, 0
      %p432 = por %p430, %p431
      %p433 = scmp.ne.s32.totalorder %s419, %s420
      %p434 = scmp.eq.s32.totalorder %s34, 3
      %p435 = por %p433, %p434
      %p437 = scmp.ne.s32.totalorder %s420, %s436
      %p438 = scmp.eq.s32.totalorder %s34, 0
      %p439 = por %p437, %p438
      %s440 = smul.u32 %s35, 2
      %s441 = sadd.s32 %s440, %s36
      %s442 = smul.u32 %s47, 2
      %s443 = sadd.s32 %s442, %s43
      %s444 = ssub.s32 %s441, %s443
      %p445 = scmp.eq.s32.totalorder %s444, 0
      %s447 = sadd.s32 %s446, 1
      %s448 = scalar_select %p445, %s446, %s447
      %p451 = pneg %p445
      %p452 = scmp.eq.s32.totalorder %s28, 3
      %p453 = por %p451, %p452
      %p454 = scmp.ne.s32.totalorder %s446, %s449
      %p455 = scmp.eq.s32.totalorder %s28, 0
      %p456 = por %p454, %p455
      %p457 = scmp.ne.s32.totalorder %s446, %s449
      %p458 = scmp.eq.s32.totalorder %s33, 3
      %p459 = por %p457, %p458
      %p460 = scmp.ne.s32.totalorder %s449, %s450
      %p461 = scmp.eq.s32.totalorder %s33, 0
      %p462 = por %p460, %p461
      %p463 = scmp.ne.s32.totalorder %s449, %s450
      %p464 = scmp.eq.s32.totalorder %s34, 3
      %p465 = por %p463, %p464
      %p467 = scmp.ne.s32.totalorder %s450, %s466
      %p468 = scmp.eq.s32.totalorder %s34, 0
      %p469 = por %p467, %p468
      %s470 = smul.u32 %s35, 2
      %s471 = sadd.s32 %s470, %s36
      %s472 = smul.u32 %s47, 2
      %s473 = sadd.s32 %s472, %s43
      %s474 = ssub.s32 %s471, %s473
      %p475 = scmp.eq.s32.totalorder %s474, 0
      %s477 = sadd.s32 %s476, 1
      %s478 = scalar_select %p475, %s476, %s477
      %p481 = pneg %p475
      %p482 = scmp.eq.s32.totalorder %s28, 3
      %p483 = por %p481, %p482
      %p484 = scmp.ne.s32.totalorder %s476, %s479
      %p485 = scmp.eq.s32.totalorder %s28, 0
      %p486 = por %p484, %p485
      %p487 = scmp.ne.s32.totalorder %s476, %s479
      %p488 = scmp.eq.s32.totalorder %s33, 3
      %p489 = por %p487, %p488
      %p490 = scmp.ne.s32.totalorder %s479, %s480
      %p491 = scmp.eq.s32.totalorder %s33, 0
      %p492 = por %p490, %p491
      %p493 = scmp.ne.s32.totalorder %s479, %s480
      %p494 = scmp.eq.s32.totalorder %s34, 3
      %p495 = por %p493, %p494
      %p497 = scmp.ne.s32.totalorder %s480, %s496
      %p498 = scmp.eq.s32.totalorder %s34, 0
      %p499 = por %p497, %p498
      %p500 = scmp.le.s32.totalorder 1, %s28
      %p501 = scmp.lt.s32.totalorder %s28, 5
      %p502 = pnand %p500, %p501
      %p503 = pneg %p502
      // Predicated region
      $region9: #{tpu_custom_call.1} parent=5 // pred_check
        _
      $region10: #{tpu_custom_call.1} parent=5 // pred_check_branch
        %505 = sbr.rel (%p502) target = $region12
      $region11: #{tpu_custom_call.1} parent=5 // pred_region
        %s506 = ssub.s32 %s28, 1
      $region12: #{tpu_custom_call.1} parent=5 // pred_fallthru
        _
      %p507 = scmp.lt.s32.totalorder %s28, 4
      // Predicated region
      $region13: #{tpu_custom_call.1} parent=5 // pred_check
        %p508 = pneg %p507
      $region14: #{tpu_custom_call.1} parent=5 // pred_check_branch
        %510 = sbr.rel (%p508) target = $region16
      $region15: #{tpu_custom_call.1} parent=5 // pred_region
        // Predicated region
        $region17: #{tpu_custom_call.1} parent=15 // pred_check
          %p511 = pneg %p62
        $region18: #{tpu_custom_call.1} parent=15 // pred_check_branch
          %513 = sbr.rel (%p511) target = $region20
        $region19: #{tpu_custom_call.1} parent=15 // pred_region
          %s514 = smul.u32 4, %s36
          %p515 = scmp.lt.s32.totalorder %s35, 1
          %s516 = scalar_select %p515, %s35, 1
          %p517 = scmp.lt.s32.totalorder %s514, 7
          %s518 = scalar_select %p517, %s514, 7
          %s519 = smul.addr %s516, 8
          %s520 = sadd.s32 %s518, %s519
          %s521 = smul.addr %s520, 4
          %s522 = scalar_lea.vmem %s0, %s521
          %s523 = smul.u32 4, %s36
        $region20: #{tpu_custom_call.1} parent=15 // pred_fallthru
          _
        // Predicated region
        $region21: #{tpu_custom_call.1} parent=15 // pred_check
          %p524 = pneg %p90
        $region22: #{tpu_custom_call.1} parent=15 // pred_check_branch
          %526 = sbr.rel (%p524) target = $region24
        $region23: #{tpu_custom_call.1} parent=15 // pred_region
          %s527 = sand.u32 %s80, 1
          %s528 = sand.u32 %s80, 1
          %s529 = smul.addr %s528, 64
          %s530 = scalar_lea.vmem [#allocation2], %s529
          %s531 = smul.u32 4, %s36
          %s532 = smul.addr %s35, 16
          %s533 = sadd.s32 %s531, %s532
          %s534 = smul.addr %s533, 8
          %s535 = scalar_lea.vmem %s1, %s534
          // Predicated region
          $region25: #{tpu_custom_call.1} parent=23 // pred_check
            _
          $region26: #{tpu_custom_call.1} parent=23 // pred_check_branch
            %537 = sbr.rel (0) target = $region28
          $region27: #{tpu_custom_call.1} parent=23 // pred_region
            // Predicated region
            $region29: #{tpu_custom_call.1} parent=27 // pred_check
              _
            $region30: #{tpu_custom_call.1} parent=27 // pred_check_branch
              %539 = sbr.rel (0) target = $region32
            $region31: #{tpu_custom_call.1} parent=27 // pred_region
              loop: start=0, step=1, limit=1
              $region33: #{tpu_custom_call.1} parent=31 // loop_pre_header
                _
              $region34: #{tpu_custom_call.1} parent=31 // loop_header
                %s541 = sphi 0, %s545
                %p542 = scmp.ge.s32.totalorder %s541, 1
                %s546 = sphi %s535, %s535
                %s547 = sphi %s530, %s530
              $region35: #{tpu_custom_call.1} parent=31 // loop_header_branch
                %544 = sbr.rel (%p542) target = $region39
              $region36: #{tpu_custom_call.1} parent=31 // loop_body
                %v548 = vld [vmem:[%s546] sm:$0xff]
                %549 = vst [vmem:[%s547] sm:$0xff] %v548
                %v550 = vld [vmem:[%s546 + $0x8] sm:$0xff]
                %551 = vst [vmem:[%s547 + $0x8] sm:$0xff] %v550
                %v552 = vld [vmem:[%s546 + $0x10] sm:$0xff]
                %553 = vst [vmem:[%s547 + $0x10] sm:$0xff] %v552
                %v554 = vld [vmem:[%s546 + $0x18] sm:$0xff]
                %555 = vst [vmem:[%s547 + $0x18] sm:$0xff] %v554
                %v556 = vld [vmem:[%s546 + $0x40] sm:$0xff]
                %557 = vst [vmem:[%s547 + $0x20] sm:$0xff] %v556
                %v558 = vld [vmem:[%s546 + $0x48] sm:$0xff]
                %559 = vst [vmem:[%s547 + $0x28] sm:$0xff] %v558
                %v560 = vld [vmem:[%s546 + $0x50] sm:$0xff]
                %561 = vst [vmem:[%s547 + $0x30] sm:$0xff] %v560
                %v562 = vld [vmem:[%s546 + $0x58] sm:$0xff]
                %563 = vst [vmem:[%s547 + $0x38] sm:$0xff] %v562
              $region37: #{tpu_custom_call.1} parent=31 // loop_footer
                %s545 = sadd.s32 1, %s541
              $region38: #{tpu_custom_call.1} parent=31 // loop_footer_branch
                %540 = sbr.rel target = $region34
              $region39: #{tpu_custom_call.1} parent=31 // loop_exit
                _
            $region32: #{tpu_custom_call.1} parent=27 // pred_fallthru
              _
            // Predicated region
            $region40: #{tpu_custom_call.1} parent=27 // pred_check
              _
            $region41: #{tpu_custom_call.1} parent=27 // pred_check_branch
              %565 = sbr.rel target = $region43
            $region42: #{tpu_custom_call.1} parent=27 // pred_region
              _
            $region43: #{tpu_custom_call.1} parent=27 // pred_fallthru
              _
          $region28: #{tpu_custom_call.1} parent=23 // pred_fallthru
            _
          %566 = vnop
        $region24: #{tpu_custom_call.1} parent=15 // pred_fallthru
          _
        // Predicated region
        $region44: #{tpu_custom_call.1} parent=15 // pred_check
          %p567 = pneg %p118
        $region45: #{tpu_custom_call.1} parent=15 // pred_check_branch
          %569 = sbr.rel (%p567) target = $region47
        $region46: #{tpu_custom_call.1} parent=15 // pred_region
          %s570 = smul.u32 4, %s36
          %p571 = scmp.lt.s32.totalorder %s35, 1
          %s572 = scalar_select %p571, %s35, 1
          %p573 = scmp.lt.s32.totalorder %s570, 7
          %s574 = scalar_select %p573, %s570, 7
          %s575 = smul.addr %s572, 8
          %s576 = sadd.s32 %s574, %s575
          %s577 = smul.addr %s576, 4
          %s578 = scalar_lea.vmem %s2, %s577
          %s579 = smul.u32 4, %s36
        $region47: #{tpu_custom_call.1} parent=15 // pred_fallthru
          _
        // Predicated region
        $region48: #{tpu_custom_call.1} parent=15 // pred_check
          %p580 = pneg %p146
        $region49: #{tpu_custom_call.1} parent=15 // pred_check_branch
          %582 = sbr.rel (%p580) target = $region51
        $region50: #{tpu_custom_call.1} parent=15 // pred_region
          %s583 = smul.u32 4, %s36
          %p584 = scmp.lt.s32.totalorder %s35, 1
          %s585 = scalar_select %p584, %s35, 1
          %p586 = scmp.lt.s32.totalorder %s583, 7
          %s587 = scalar_select %p586, %s583, 7
          %s588 = smul.addr %s585, 8
          %s589 = sadd.s32 %s587, %s588
          %s590 = smul.addr %s589, 4
          %s591 = scalar_lea.vmem %s3, %s590
          %s592 = smul.u32 4, %s36
        $region51: #{tpu_custom_call.1} parent=15 // pred_fallthru
          _
        // Predicated region
        $region52: #{tpu_custom_call.1} parent=15 // pred_check
          %p593 = pneg %p174
        $region53: #{tpu_custom_call.1} parent=15 // pred_check_branch
          %595 = sbr.rel (%p593) target = $region55
        $region54: #{tpu_custom_call.1} parent=15 // pred_region
          %s596 = smul.u32 4, %s36
          %p597 = scmp.lt.s32.totalorder %s35, 1
          %s598 = scalar_select %p597, %s35, 1
          %p599 = scmp.lt.s32.totalorder %s596, 7
          %s600 = scalar_select %p599, %s596, 7
          %s601 = smul.addr %s598, 8
          %s602 = sadd.s32 %s600, %s601
          %s603 = smul.addr %s602, 4
          %s604 = scalar_lea.vmem %s4, %s603
          %s605 = smul.u32 4, %s36
        $region55: #{tpu_custom_call.1} parent=15 // pred_fallthru
          _
        // Predicated region
        $region56: #{tpu_custom_call.1} parent=15 // pred_check
          %p606 = pneg %p202
        $region57: #{tpu_custom_call.1} parent=15 // pred_check_branch
          %608 = sbr.rel (%p606) target = $region59
        $region58: #{tpu_custom_call.1} parent=15 // pred_region
          %s609 = smul.u32 4, %s36
          %p610 = scmp.lt.s32.totalorder %s35, 1
          %s611 = scalar_select %p610, %s35, 1
          %p612 = scmp.lt.s32.totalorder %s609, 7
          %s613 = scalar_select %p612, %s609, 7
          %s614 = smul.addr %s611, 8
          %s615 = sadd.s32 %s613, %s614
          %s616 = scalar_lea.vmem %s5, %s615
          %s617 = smul.u32 4, %s36
        $region59: #{tpu_custom_call.1} parent=15 // pred_fallthru
          _
        // Predicated region
        $region60: #{tpu_custom_call.1} parent=15 // pred_check
          %p618 = pneg %p230
        $region61: #{tpu_custom_call.1} parent=15 // pred_check_branch
          %620 = sbr.rel (%p618) target = $region63
        $region62: #{tpu_custom_call.1} parent=15 // pred_region
          %s621 = smul.u32 4, %s36
          %p622 = scmp.lt.s32.totalorder %s35, 1
          %s623 = scalar_select %p622, %s35, 1
          %p624 = scmp.lt.s32.totalorder %s621, 7
          %s625 = scalar_select %p624, %s621, 7
          %s626 = smul.addr %s623, 8
          %s627 = sadd.s32 %s625, %s626
          %s628 = scalar_lea.vmem %s6, %s627
          %s629 = smul.u32 4, %s36
        $region63: #{tpu_custom_call.1} parent=15 // pred_fallthru
          _
      $region16: #{tpu_custom_call.1} parent=5 // pred_fallthru
        _
      %p630 = scmp.le.s32.totalorder 1, %s28
      %p631 = scmp.lt.s32.totalorder %s28, 5
      %p632 = pnand %p630, %p631
      %p633 = pneg %p632
      // Predicated region
      $region64: #{tpu_custom_call.1} parent=5 // pred_check
        _
      $region65: #{tpu_custom_call.1} parent=5 // pred_check_branch
        %635 = sbr.rel (%p632) target = $region67
      $region66: #{tpu_custom_call.1} parent=5 // pred_region
        %s636 = ssub.s32 %s28, 1
        %s637 = sand.u32 %s83, 1
        %s638 = sand.u32 %s83, 1
        %s639 = smul.addr %s638, 64
        %s640 = scalar_lea.vmem [#allocation2], %s639
        // Predicated region
        $region68: #{tpu_custom_call.1} parent=66 // pred_check
          %p641 = pneg %p96
        $region69: #{tpu_custom_call.1} parent=66 // pred_check_branch
          %643 = sbr.rel (%p641) target = $region71
        $region70: #{tpu_custom_call.1} parent=66 // pred_region
          _
        $region71: #{tpu_custom_call.1} parent=66 // pred_fallthru
          _
        %s644 = smul.u32 4, %s38
        %p645 = scmp.lt.s32.totalorder %s37, 1
        %s646 = scalar_select %p645, %s37, 1
        %p647 = scmp.lt.s32.totalorder %s644, 7
        %s648 = scalar_select %p647, %s644, 7
        %s649 = smul.addr %s646, 8
        %s650 = sadd.s32 %s648, %s649
        %s651 = smul.addr %s650, 4
        %s652 = scalar_lea.vmem %s0, %s651
        %p653 = pneg %p68
        %p654 = pneg %p65
        %s655 = sand.u32 %s83, 1
        %s656 = sand.u32 %s83, 1
        %s657 = smul.addr %s656, 64
        %s658 = scalar_lea.vmem [#allocation2], %s657
        %p659 = pneg %p96
        %p660 = pneg %p93
        %s661 = smul.u32 4, %s38
        %p662 = scmp.lt.s32.totalorder %s37, 1
        %s663 = scalar_select %p662, %s37, 1
        %p664 = scmp.lt.s32.totalorder %s661, 7
        %s665 = scalar_select %p664, %s661, 7
        %s666 = smul.addr %s663, 8
        %s667 = sadd.s32 %s665, %s666
        %s668 = smul.addr %s667, 4
        %s669 = scalar_lea.vmem %s2, %s668
        %p670 = pneg %p124
        %p671 = pneg %p121
        %s672 = smul.u32 4, %s38
        %p673 = scmp.lt.s32.totalorder %s37, 1
        %s674 = scalar_select %p673, %s37, 1
        %p675 = scmp.lt.s32.totalorder %s672, 7
        %s676 = scalar_select %p675, %s672, 7
        %s677 = smul.addr %s674, 8
        %s678 = sadd.s32 %s676, %s677
        %s679 = smul.addr %s678, 4
        %s680 = scalar_lea.vmem %s3, %s679
        %p681 = pneg %p152
        %p682 = pneg %p149
        %s683 = smul.u32 4, %s38
        %p684 = scmp.lt.s32.totalorder %s37, 1
        %s685 = scalar_select %p684, %s37, 1
        %p686 = scmp.lt.s32.totalorder %s683, 7
        %s687 = scalar_select %p686, %s683, 7
        %s688 = smul.addr %s685, 8
        %s689 = sadd.s32 %s687, %s688
        %s690 = smul.addr %s689, 4
        %s691 = scalar_lea.vmem %s4, %s690
        %p692 = pneg %p180
        %p693 = pneg %p177
        %s694 = smul.u32 4, %s38
        %p695 = scmp.lt.s32.totalorder %s37, 1
        %s696 = scalar_select %p695, %s37, 1
        %p697 = scmp.lt.s32.totalorder %s694, 7
        %s698 = scalar_select %p697, %s694, 7
        %s699 = smul.addr %s696, 8
        %s700 = sadd.s32 %s698, %s699
        %s701 = scalar_lea.vmem %s5, %s700
        %p702 = pneg %p208
        %p703 = pneg %p205
        %s704 = smul.u32 4, %s38
        %p705 = scmp.lt.s32.totalorder %s37, 1
        %s706 = scalar_select %p705, %s37, 1
        %p707 = scmp.lt.s32.totalorder %s704, 7
        %s708 = scalar_select %p707, %s704, 7
        %s709 = smul.addr %s706, 8
        %s710 = sadd.s32 %s708, %s709
        %s711 = scalar_lea.vmem %s6, %s710
        %p712 = pneg %p236
        %p713 = pneg %p233
        %p714 = pneg %p264
        %p715 = pneg %p261
        %s716 = smul.u32 4, %s38
        %p717 = scmp.lt.s32.totalorder %s37, 1
        %s718 = scalar_select %p717, %s37, 1
        %p719 = scmp.lt.s32.totalorder %s716, 7
        %s720 = scalar_select %p719, %s716, 7
        %s721 = smul.addr %s718, 8
        %s722 = sadd.s32 %s720, %s721
        %s723 = smul.addr %s722, 8
        %s724 = scalar_lea.vmem %s7, %s723
        %p725 = pneg %p292
        %p726 = pneg %p289
        %s727 = smul.u32 4, %s38
        %p728 = scmp.lt.s32.totalorder %s37, 1
        %s729 = scalar_select %p728, %s37, 1
        %p730 = scmp.lt.s32.totalorder %s727, 7
        %s731 = scalar_select %p730, %s727, 7
        %s732 = smul.addr %s729, 8
        %s733 = sadd.s32 %s731, %s732
        %s734 = smul.addr %s733, 4
        %s735 = scalar_lea.vmem %s8, %s734
        %p736 = pneg %p320
        %p737 = pneg %p317
        %s738 = sand.u32 %s307, 1
        %s739 = scalar_lea.sflag [#allocation4], %s738
        %s740 = sand.u32 %s307, 1
        %s741 = smul.addr %s740, 4
        %s742 = scalar_lea.vmem [#allocation3], %s741
        %p743 = pneg %p348
        %p744 = pneg %p345
        %s745 = sand.u32 %s33, 1
        %s746 = scalar_lea.sflag [#allocation6], %s745
        %s747 = sand.u32 %s335, 1
        %s748 = smul.addr %s747, 16
        %s749 = scalar_lea.vmem [#allocation5], %s748
        %p750 = pneg %p376
        %p751 = pneg %p373
        %s752 = sand.u32 %s33, 1
        %s753 = scalar_lea.sflag [#allocation6], %s752
        %s754 = sand.u32 %s363, 1
        %s755 = smul.addr %s754, 4
        %s756 = scalar_lea.vmem [#allocation7], %s755
        %p757 = pneg %p404
        %p758 = pneg %p401
        %s759 = sand.u32 %s391, 1
        %s760 = sand.u32 %s391, 1
        %s761 = smul.addr %s760, 64
        %s762 = scalar_lea.vmem [#allocation8], %s761
        %p763 = pneg %p432
        %p764 = pneg %p429
        %s765 = smul.u32 4, %s38
        %p766 = scmp.lt.s32.totalorder %s37, 1
        %s767 = scalar_select %p766, %s37, 1
        %p768 = scmp.lt.s32.totalorder %s765, 7
        %s769 = scalar_select %p768, %s765, 7
        %s770 = smul.addr %s767, 8
        %s771 = sadd.s32 %s769, %s770
        %s772 = smul.addr %s771, 8
        %s773 = scalar_lea.vmem %s13, %s772
        %p774 = pneg %p462
        %p775 = pneg %p459
        %s776 = smul.u32 %s37, 2
        %s777 = sadd.s32 %s776, %s38
        %p778 = scmp.lt.s32.totalorder %s777, 3
        %s779 = scalar_select %p778, %s777, 3
        %s780 = smul.addr %s779, 4
        %s781 = scalar_lea.vmem %s14, %s780
        %p782 = pneg %p492
        %p783 = pneg %p489
        %s784 = smul.u32 %s37, 2
        %s785 = sadd.s32 %s784, %s38
        %p786 = scmp.lt.s32.totalorder %s785, 3
        %s787 = scalar_select %p786, %s785, 3
        %s788 = smul.addr %s787, 4
        %s789 = scalar_lea.vmem %s15, %s788
        %s790 = smul.u32 4, %s38
        %p791 = scmp.lt.s32.totalorder %s37, 1
        %s792 = scalar_select %p791, %s37, 1
        %p793 = scmp.lt.s32.totalorder %s790, 7
        %s794 = scalar_select %p793, %s790, 7
        %s795 = smul.addr %s792, 8
        %s796 = sadd.s32 %s794, %s795
        %s797 = smul.addr %s796, 4
        %s798 = scalar_lea.vmem %s0, %s797
        %s799 = smul.u32 4, %s38
        %s800 = smul.u32 4, %s38
        %s801 = smul.u32 4, %s38
        %p802 = scmp.lt.s32.totalorder %s37, 1
        %s803 = scalar_select %p802, %s37, 1
        %p804 = scmp.lt.s32.totalorder %s801, 7
        %s805 = scalar_select %p804, %s801, 7
        %s806 = smul.addr %s803, 8
        %s807 = sadd.s32 %s805, %s806
        %s808 = smul.addr %s807, 4
        %s809 = scalar_lea.vmem %s2, %s808
        %s810 = smul.u32 4, %s38
        %s811 = smul.u32 4, %s38
        %p812 = scmp.lt.s32.totalorder %s37, 1
        %s813 = scalar_select %p812, %s37, 1
        %p814 = scmp.lt.s32.totalorder %s811, 7
        %s815 = scalar_select %p814, %s811, 7
        %s816 = smul.addr %s813, 8
        %s817 = sadd.s32 %s815, %s816
        %s818 = smul.addr %s817, 4
        %s819 = scalar_lea.vmem %s3, %s818
        %s820 = smul.u32 4, %s38
        %s821 = smul.u32 4, %s38
        %p822 = scmp.lt.s32.totalorder %s37, 1
        %s823 = scalar_select %p822, %s37, 1
        %p824 = scmp.lt.s32.totalorder %s821, 7
        %s825 = scalar_select %p824, %s821, 7
        %s826 = smul.addr %s823, 8
        %s827 = sadd.s32 %s825, %s826
        %s828 = smul.addr %s827, 4
        %s829 = scalar_lea.vmem %s4, %s828
        %s830 = smul.u32 4, %s38
        %s831 = smul.u32 4, %s38
        %p832 = scmp.lt.s32.totalorder %s37, 1
        %s833 = scalar_select %p832, %s37, 1
        %p834 = scmp.lt.s32.totalorder %s831, 7
        %s835 = scalar_select %p834, %s831, 7
        %s836 = smul.addr %s833, 8
        %s837 = sadd.s32 %s835, %s836
        %s838 = scalar_lea.vmem %s5, %s837
        %s839 = smul.u32 4, %s38
        %s840 = smul.u32 4, %s38
        %p841 = scmp.lt.s32.totalorder %s37, 1
        %s842 = scalar_select %p841, %s37, 1
        %p843 = scmp.lt.s32.totalorder %s840, 7
        %s844 = scalar_select %p843, %s840, 7
        %s845 = smul.addr %s842, 8
        %s846 = sadd.s32 %s844, %s845
        %s847 = scalar_lea.vmem %s6, %s846
        %s848 = smul.u32 4, %s38
        %s849 = smul.u32 4, %s38
        %p850 = scmp.lt.s32.totalorder %s37, 1
        %s851 = scalar_select %p850, %s37, 1
        %p852 = scmp.lt.s32.totalorder %s849, 7
        %s853 = scalar_select %p852, %s849, 7
        %s854 = smul.addr %s851, 8
        %s855 = sadd.s32 %s853, %s854
        %s856 = smul.addr %s855, 8
        %s857 = scalar_lea.vmem %s7, %s856
        %s858 = smul.u32 4, %s38
        %s859 = smul.u32 4, %s38
        %p860 = scmp.lt.s32.totalorder %s37, 1
        %s861 = scalar_select %p860, %s37, 1
        %p862 = scmp.lt.s32.totalorder %s859, 7
        %s863 = scalar_select %p862, %s859, 7
        %s864 = smul.addr %s861, 8
        %s865 = sadd.s32 %s863, %s864
        %s866 = smul.addr %s865, 4
        %s867 = scalar_lea.vmem %s8, %s866
        %s868 = smul.u32 4, %s38
        %s869 = smul.u32 4, %s38
        %s870 = smul.u32 4, %s38
        %s871 = smul.u32 4, %s38
        %s872 = smul.u32 4, %s38
        %s873 = smul.u32 4, %s38
        %p874 = scmp.lt.s32.totalorder %s37, 1
        %s875 = scalar_select %p874, %s37, 1
        %p876 = scmp.lt.s32.totalorder %s873, 7
        %s877 = scalar_select %p876, %s873, 7
        %s878 = smul.addr %s875, 8
        %s879 = sadd.s32 %s877, %s878
        %s880 = smul.addr %s879, 8
        %s881 = scalar_lea.vmem %s13, %s880
        %s882 = smul.u32 4, %s38
        %s883 = smul.u32 %s37, 2
        %s884 = sadd.s32 %s883, %s38
        %p885 = scmp.lt.s32.totalorder %s884, 3
        %s886 = scalar_select %p885, %s884, 3
        %s887 = smul.addr %s886, 4
        %s888 = scalar_lea.vmem %s14, %s887
        %s889 = smul.u32 %s37, 2
        %s890 = sadd.s32 %s889, %s38
        %s891 = smul.u32 %s37, 2
        %s892 = sadd.s32 %s891, %s38
        %p893 = scmp.lt.s32.totalorder %s892, 3
        %s894 = scalar_select %p893, %s892, 3
        %s895 = smul.addr %s894, 4
        %s896 = scalar_lea.vmem %s15, %s895
        %s897 = smul.u32 %s37, 2
        %s898 = sadd.s32 %s897, %s38
        %v899 = vld [vmem:[%s798] sm:$0xff]
        %v900 = vld [vmem:[%s798 + $0x8] sm:$0xff]
        %v903 = vcombine.high %v899, %v899
        %v904 = vcombine.high %v900, %v900
        %vm907 = vcmask 1043456
        %v908 = vsel %vm907, %v899, -inf
        %v909 = vrot.slane %v908, 4
        %v910 = vmax.f32 %v908, %v909
        %v911 = vrot.slane %v910, 2
        %v912 = vmax.f32 %v910, %v911
        %v913 = vrot.slane %v912, 1
        %v914 = vmax.f32 %v912, %v913
        %v915 = vsel %vm907, %v903, -inf
        %v916 = vrot.slane %v915, 4
        %v917 = vmax.f32 %v915, %v916
        %v918 = vrot.slane %v917, 2
        %v919 = vmax.f32 %v917, %v918
        %v920 = vrot.slane %v919, 1
        %v921 = vmax.f32 %v919, %v920
        %v922 = vsel %vm907, %v900, -inf
        %v923 = vrot.slane %v922, 4
        %v924 = vmax.f32 %v922, %v923
        %v925 = vrot.slane %v924, 2
        %v926 = vmax.f32 %v924, %v925
        %v927 = vrot.slane %v926, 1
        %v928 = vmax.f32 %v926, %v927
        %v929 = vsel %vm907, %v904, -inf
        %v930 = vrot.slane %v929, 4
        %v931 = vmax.f32 %v929, %v930
        %v932 = vrot.slane %v931, 2
        %v933 = vmax.f32 %v931, %v932
        %v934 = vrot.slane %v933, 1
        %v935 = vmax.f32 %v933, %v934
        %v936 = vmax.f32 %v914, 1.0
        %v937 = vmax.f32 %v921, 1.0
        %v938 = vmax.f32 %v928, 1.0
        %v939 = vmax.f32 %v935, 1.0
        %v944 = vcombine.low %v936, %v937
        %v945 = vcombine.low %v938, %v939
        %v948 = vsub.f32 %v899, %v944
        %v949 = vsub.f32 %v900, %v945
        %v950 = vmul.f32 %v948, 1.442695
        %v951 = vpow.pop %v950
        %v952 = vmul.f32 %v949, 1.442695
        %v953 = vpow.pop %v952
        %v954 = vsub.f32 1.0, %v936
        %v955 = vsub.f32 1.0, %v937
        %v956 = vsub.f32 1.0, %v938
        %v957 = vsub.f32 1.0, %v939
        %v958 = vmul.f32 %v954, 1.442695
        %v959 = vpow.pop %v958
        %v960 = vmul.f32 %v955, 1.442695
        %v961 = vpow.pop %v960
        %v962 = vmul.f32 %v956, 1.442695
        %v963 = vpow.pop %v962
        %v964 = vmul.f32 %v957, 1.442695
        %v965 = vpow.pop %v964
        %v968 = vcombine.high %v951, %v951
        %v969 = vcombine.high %v953, %v953
        %v972 = vsel %vm907, %v951, 0.0
        %v973 = vrot.slane %v972, 4
        %v974 = vadd.f32 %v972, %v973
        %v975 = vrot.slane %v974, 2
        %v976 = vadd.f32 %v974, %v975
        %v977 = vrot.slane %v976, 1
        %v978 = vadd.f32 %v976, %v977
        %v979 = vsel %vm907, %v968, 0.0
        %v980 = vrot.slane %v979, 4
        %v981 = vadd.f32 %v979, %v980
        %v982 = vrot.slane %v981, 2
        %v983 = vadd.f32 %v981, %v982
        %v984 = vrot.slane %v983, 1
        %v985 = vadd.f32 %v983, %v984
        %v986 = vsel %vm907, %v953, 0.0
        %v987 = vrot.slane %v986, 4
        %v988 = vadd.f32 %v986, %v987
        %v989 = vrot.slane %v988, 2
        %v990 = vadd.f32 %v988, %v989
        %v991 = vrot.slane %v990, 1
        %v992 = vadd.f32 %v990, %v991
        %v993 = vsel %vm907, %v969, 0.0
        %v994 = vrot.slane %v993, 4
        %v995 = vadd.f32 %v993, %v994
        %v996 = vrot.slane %v995, 2
        %v997 = vadd.f32 %v995, %v996
        %v998 = vrot.slane %v997, 1
        %v999 = vadd.f32 %v997, %v998
        %v1000 = vadd.f32 %v978, %v959
        %v1001 = vadd.f32 %v985, %v961
        %v1002 = vadd.f32 %v992, %v963
        %v1003 = vadd.f32 %v999, %v965
        %v1004 = vrcp.pop %v1000
        %v1005 = vrcp.pop %v1001
        %v1006 = vrcp.pop %v1002
        %v1007 = vrcp.pop %v1003
        %v1008 = vmul.f32 %v1000, %v1004
        %v1009 = vmul.f32 %v1001, %v1005
        %v1010 = vmul.f32 %v1002, %v1006
        %v1011 = vmul.f32 %v1003, %v1007
        %v1012 = vsub.f32 2.0, %v1008
        %v1013 = vsub.f32 2.0, %v1009
        %v1014 = vsub.f32 2.0, %v1010
        %v1015 = vsub.f32 2.0, %v1011
        %v1016 = vmul.f32 %v1004, %v1012
        %v1017 = vmul.f32 %v1005, %v1013
        %v1018 = vmul.f32 %v1006, %v1014
        %v1019 = vmul.f32 %v1007, %v1015
        %v1024 = vcombine.low %v1016, %v1017
        %v1025 = vcombine.low %v1018, %v1019
        %v1028 = vmul.f32 %v951, %v1024
        %v1029 = vmul.f32 %v953, %v1025
        %v1030 = vmul.f32 %v959, %v1016
        %v1031 = vmul.f32 %v961, %v1017
        %v1032 = vmul.f32 %v963, %v1018
        %v1033 = vmul.f32 %v965, %v1019
        %v1036 = vcombine.high %v1028, %v1028
        %v1037 = vcombine.high %v1029, %v1029
        %1040 = vst [vmem:[%s857] sm:$0xf] %v1028
        %1041 = vst [vmem:[%s857 + $0x8] sm:$0xf] %v1036
        %1042 = vst [vmem:[%s857 + $0x10] sm:$0xf] %v1029
        %1043 = vst [vmem:[%s857 + $0x18] sm:$0xf] %v1037
        %v1048 = vcombine.low %v1030, %v1031
        %v1049 = vcombine.low %v1032, %v1033
        %v1051 = vunpack.c.l.s4 1966171168
        %v1052 = vunpack.c.0.s8 %v1051
        %v1053 = vlaneseq
        %v1054 = vshrl.u32 %v1053, 7
        %v1055 = vsub.s32 %v1052, %v1054
        %v1056 = vrot.slane %v1048, %v1055
        %v1058 = vunpack.c.l.s4 1966171168
        %v1059 = vunpack.c.0.s8 %v1058
        %v1060 = vlaneseq
        %v1061 = vshrl.u32 %v1060, 7
        %v1062 = vsub.s32 %v1059, %v1061
        %v1063 = vrot.slane %v1049, %v1062
        %v1064 = vcombine.low %v1056, %v1063
        %v1066 = vunpack.c.l.s4 1966171168
        %v1067 = vunpack.c.0.s8 %v1066
        %v1068 = vlaneseq
        %v1069 = vshrl.u32 %v1068, 7
        %v1070 = vsub.s32 %v1067, %v1069
        %v1071 = vrot.slane %v1064, %v1070
        %v1073 = vlaneseq
        %vm1074 = vcmp.ge.s32.totalorder %v1073, 0
        %vm1075 = vcmp.lt.s32.totalorder %v1073, 512
        %vm1076 = vmand %vm1074, %vm1075
        %s1077 = scalar_lea.vmem %s857, 4
        %1078 = vst.msk [vmem:[%s1077] ss:$8 sm:$0xf] %vm1076, %v1071
        %1079 = vst.msk [vmem:[%s1077] ss:$8 sm:$0x0] %vm1076, %v1071
        %v1080 = vld [vmem:[%s829] sm:$0x77]
        %v1081 = vld [vmem:[%s829 + $0x8] sm:$0x77]
        %v1084 = vcombine.high %v1080, %v1080
        %v1085 = vcombine.high %v1081, %v1081
        %v1088 = vmul.f32 %v1030, %v1080
        %v1089 = vmul.f32 %v1031, %v1084
        %v1090 = vmul.f32 %v1032, %v1081
        %v1091 = vmul.f32 %v1033, %v1085
        %v1092 = vld [vmem:[%s640] sm:$0x7]
        %v1093 = vld [vmem:[%s640 + $0x8] sm:$0x7]
        %v1094 = vld [vmem:[%s640 + $0x10] sm:$0x7]
        %v1095 = vld [vmem:[%s640 + $0x18] sm:$0x7]
        %v1096 = vlaneseq
        %v1097 = vshrl.u32 %v1096, 7
        %v1098 = vsub.s32 0, %v1097
        %v1099 = vrot.slane %v1028, %v1098
        %v1100 = vlaneseq
        %v1101 = vshrl.u32 %v1100, 7
        %v1102 = vsub.s32 4, %v1101
        %v1103 = vrot.slane %v1028, %v1102
        %v1104 = vlaneseq
        %v1105 = vshrl.u32 %v1104, 7
        %v1106 = vsub.s32 0, %v1105
        %v1107 = vrot.slane %v1029, %v1106
        %v1108 = vlaneseq
        %v1109 = vshrl.u32 %v1108, 7
        %v1110 = vsub.s32 4, %v1109
        %v1111 = vrot.slane %v1029, %v1110
        %v1116 = vlaneseq
        %v1117 = vshrl.u32 %v1116, 7
        %v1118 = vsub.s32 0, %v1117
        %v1119 = vrot.slane %v1099, %v1118
        %v1120 = vlaneseq
        %v1121 = vshrl.u32 %v1120, 7
        %v1122 = vsub.s32 0, %v1121
        %v1123 = vrot.slane %v1103, %v1122
        %v1124 = vlaneseq
        %v1125 = vshrl.u32 %v1124, 7
        %v1126 = vsub.s32 0, %v1125
        %v1127 = vrot.slane %v1107, %v1126
        %v1128 = vlaneseq
        %v1129 = vshrl.u32 %v1128, 7
        %v1130 = vsub.s32 0, %v1129
        %v1131 = vrot.slane %v1111, %v1130
        %v1132 = vmul.f32 %v1119, %v1092
        %v1133 = vmul.f32 %v1123, %v1093
        %v1134 = vmul.f32 %v1127, %v1094
        %v1135 = vmul.f32 %v1131, %v1095
        %v1136 = vadd.f32 %v1088, %v1132
        %v1137 = vadd.f32 %v1089, %v1133
        %v1138 = vadd.f32 %v1090, %v1134
        %v1139 = vadd.f32 %v1091, %v1135
        %v1140 = vld [vmem:[%s640] sm:$0x38]
        %v1141 = vld [vmem:[%s640 + $0x8] sm:$0x38]
        %v1142 = vld [vmem:[%s640 + $0x10] sm:$0x38]
        %v1143 = vld [vmem:[%s640 + $0x18] sm:$0x38]
        %v1144 = vlaneseq
        %v1145 = vshrl.u32 %v1144, 7
        %v1146 = vsub.s32 1, %v1145
        %v1147 = vrot.slane %v1028, %v1146
        %v1148 = vlaneseq
        %v1149 = vshrl.u32 %v1148, 7
        %v1150 = vsub.s32 5, %v1149
        %v1151 = vrot.slane %v1028, %v1150
        %v1152 = vlaneseq
        %v1153 = vshrl.u32 %v1152, 7
        %v1154 = vsub.s32 1, %v1153
        %v1155 = vrot.slane %v1029, %v1154
        %v1156 = vlaneseq
        %v1157 = vshrl.u32 %v1156, 7
        %v1158 = vsub.s32 5, %v1157
        %v1159 = vrot.slane %v1029, %v1158
        %v1164 = vlaneseq
        %v1165 = vshrl.u32 %v1164, 7
        %v1166 = vsub.s32 1, %v1165
        %v1167 = vrot.slane %v1147, %v1166
        %v1168 = vlaneseq
        %v1169 = vshrl.u32 %v1168, 7
        %v1170 = vsub.s32 1, %v1169
        %v1171 = vrot.slane %v1151, %v1170
        %v1172 = vlaneseq
        %v1173 = vshrl.u32 %v1172, 7
        %v1174 = vsub.s32 1, %v1173
        %v1175 = vrot.slane %v1155, %v1174
        %v1176 = vlaneseq
        %v1177 = vshrl.u32 %v1176, 7
        %v1178 = vsub.s32 1, %v1177
        %v1179 = vrot.slane %v1159, %v1178
        %v1180 = vmul.f32 %v1167, %v1140
        %v1181 = vmul.f32 %v1171, %v1141
        %v1182 = vmul.f32 %v1175, %v1142
        %v1183 = vmul.f32 %v1179, %v1143
        %v1188 = vrot.slane %v1180, 3
        %v1189 = vrot.slane %v1181, 3
        %v1190 = vrot.slane %v1182, 3
        %v1191 = vrot.slane %v1183, 3
        %v1196 = vadd.f32 %v1136, %v1188
        %v1197 = vadd.f32 %v1137, %v1189
        %v1198 = vadd.f32 %v1138, %v1190
        %v1199 = vadd.f32 %v1139, %v1191
        %v1200 = vld [vmem:[%s640] sm:$0xc0]
        %v1201 = vld [vmem:[%s640 + $0x8] sm:$0xc0]
        %v1202 = vld [vmem:[%s640 + $0x10] sm:$0xc0]
        %v1203 = vld [vmem:[%s640 + $0x18] sm:$0xc0]
        %v1204 = vld [vmem:[%s640 + $0x20] sm:$0x1]
        %v1205 = vld [vmem:[%s640 + $0x28] sm:$0x1]
        %v1206 = vld [vmem:[%s640 + $0x30] sm:$0x1]
        %v1207 = vld [vmem:[%s640 + $0x38] sm:$0x1]
        %v1208 = vlaneseq
        %v1209 = vshrl.u32 %v1208, 7
        %v1210 = vsub.s32 2, %v1209
        %v1211 = vrot.slane %v1028, %v1210
        %v1212 = vlaneseq
        %v1213 = vshrl.u32 %v1212, 7
        %v1214 = vsub.s32 6, %v1213
        %v1215 = vrot.slane %v1028, %v1214
        %v1216 = vlaneseq
        %v1217 = vshrl.u32 %v1216, 7
        %v1218 = vsub.s32 2, %v1217
        %v1219 = vrot.slane %v1029, %v1218
        %v1220 = vlaneseq
        %v1221 = vshrl.u32 %v1220, 7
        %v1222 = vsub.s32 6, %v1221
        %v1223 = vrot.slane %v1029, %v1222
        %v1228 = vlaneseq
        %v1229 = vshrl.u32 %v1228, 7
        %v1230 = vsub.s32 2, %v1229
        %v1231 = vrot.slane %v1211, %v1230
        %v1232 = vlaneseq
        %v1233 = vshrl.u32 %v1232, 7
        %v1234 = vsub.s32 2, %v1233
        %v1235 = vrot.slane %v1215, %v1234
        %v1236 = vlaneseq
        %v1237 = vshrl.u32 %v1236, 7
        %v1238 = vsub.s32 2, %v1237
        %v1239 = vrot.slane %v1219, %v1238
        %v1240 = vlaneseq
        %v1241 = vshrl.u32 %v1240, 7
        %v1242 = vsub.s32 2, %v1241
        %v1243 = vrot.slane %v1223, %v1242
        %v1244 = vmul.f32 %v1231, %v1200
        %v1245 = vmul.f32 %v1235, %v1201
        %v1246 = vmul.f32 %v1239, %v1202
        %v1247 = vmul.f32 %v1243, %v1203
        %v1248 = vmul.f32 %v1231, %v1204
        %v1249 = vmul.f32 %v1235, %v1205
        %v1250 = vmul.f32 %v1239, %v1206
        %v1251 = vmul.f32 %v1243, %v1207
        %vm1260 = vcmask 1041408
        %v1261 = vrot.slane %v1244, 6
        %v1262 = vrot.slane %v1248, 6
        %v1263 = vsel %vm1260, %v1261, %v1262
        %v1264 = vrot.slane %v1245, 6
        %v1265 = vrot.slane %v1249, 6
        %v1266 = vsel %vm1260, %v1264, %v1265
        %v1267 = vrot.slane %v1246, 6
        %v1268 = vrot.slane %v1250, 6
        %v1269 = vsel %vm1260, %v1267, %v1268
        %v1270 = vrot.slane %v1247, 6
        %v1271 = vrot.slane %v1251, 6
        %v1272 = vsel %vm1260, %v1270, %v1271
        %v1277 = vadd.f32 %v1196, %v1263
        %v1278 = vadd.f32 %v1197, %v1266
        %v1279 = vadd.f32 %v1198, %v1269
        %v1280 = vadd.f32 %v1199, %v1272
        %v1281 = vld [vmem:[%s640 + $0x20] sm:$0xe]
        %v1282 = vld [vmem:[%s640 + $0x28] sm:$0xe]
        %v1283 = vld [vmem:[%s640 + $0x30] sm:$0xe]
        %v1284 = vld [vmem:[%s640 + $0x38] sm:$0xe]
        %v1285 = vlaneseq
        %v1286 = vshrl.u32 %v1285, 7
        %v1287 = vsub.s32 3, %v1286
        %v1288 = vrot.slane %v1028, %v1287
        %v1289 = vlaneseq
        %v1290 = vshrl.u32 %v1289, 7
        %v1291 = vsub.s32 7, %v1290
        %v1292 = vrot.slane %v1028, %v1291
        %v1293 = vlaneseq
        %v1294 = vshrl.u32 %v1293, 7
        %v1295 = vsub.s32 3, %v1294
        %v1296 = vrot.slane %v1029, %v1295
        %v1297 = vlaneseq
        %v1298 = vshrl.u32 %v1297, 7
        %v1299 = vsub.s32 7, %v1298
        %v1300 = vrot.slane %v1029, %v1299
        %v1305 = vlaneseq
        %v1306 = vshrl.u32 %v1305, 7
        %v1307 = vsub.s32 3, %v1306
        %v1308 = vrot.slane %v1288, %v1307
        %v1309 = vlaneseq
        %v1310 = vshrl.u32 %v1309, 7
        %v1311 = vsub.s32 3, %v1310
        %v1312 = vrot.slane %v1292, %v1311
        %v1313 = vlaneseq
        %v1314 = vshrl.u32 %v1313, 7
        %v1315 = vsub.s32 3, %v1314
        %v1316 = vrot.slane %v1296, %v1315
        %v1317 = vlaneseq
        %v1318 = vshrl.u32 %v1317, 7
        %v1319 = vsub.s32 3, %v1318
        %v1320 = vrot.slane %v1300, %v1319
        %v1321 = vmul.f32 %v1308, %v1281
        %v1322 = vmul.f32 %v1312, %v1282
        %v1323 = vmul.f32 %v1316, %v1283
        %v1324 = vmul.f32 %v1320, %v1284
        %v1329 = vrot.slane %v1321, 1
        %v1330 = vrot.slane %v1322, 1
        %v1331 = vrot.slane %v1323, 1
        %v1332 = vrot.slane %v1324, 1
        %v1337 = vadd.f32 %v1277, %v1329
        %v1338 = vadd.f32 %v1278, %v1330
        %v1339 = vadd.f32 %v1279, %v1331
        %v1340 = vadd.f32 %v1280, %v1332
        %v1345 = vcombine.low %v1337, %v1338
        %v1346 = vcombine.low %v1339, %v1340
        %1349 = vst [vmem:[%s867] sm:$0x77] %v1345
        %1350 = vst [vmem:[%s867 + $0x8] sm:$0x77] %v1346
        %v1351 = vld [vmem:[%s809] sm:$0xff]
        %v1352 = vld [vmem:[%s809 + $0x8] sm:$0xff]
        %v1353 = vmul.f32 %v1028, %v1351
        %v1354 = vmul.f32 %v1029, %v1352
        %v1357 = vcombine.high %v1353, %v1353
        %v1358 = vcombine.high %v1354, %v1354
        %v1361 = vsel %vm907, %v1353, 0.0
        %v1362 = vrot.slane %v1361, 4
        %v1363 = vadd.f32 %v1361, %v1362
        %v1364 = vrot.slane %v1363, 2
        %v1365 = vadd.f32 %v1363, %v1364
        %v1366 = vrot.slane %v1365, 1
        %v1367 = vadd.f32 %v1365, %v1366
        %v1368 = vsel %vm907, %v1357, 0.0
        %v1369 = vrot.slane %v1368, 4
        %v1370 = vadd.f32 %v1368, %v1369
        %v1371 = vrot.slane %v1370, 2
        %v1372 = vadd.f32 %v1370, %v1371
        %v1373 = vrot.slane %v1372, 1
        %v1374 = vadd.f32 %v1372, %v1373
        %v1375 = vsel %vm907, %v1354, 0.0
        %v1376 = vrot.slane %v1375, 4
        %v1377 = vadd.f32 %v1375, %v1376
        %v1378 = vrot.slane %v1377, 2
        %v1379 = vadd.f32 %v1377, %v1378
        %v1380 = vrot.slane %v1379, 1
        %v1381 = vadd.f32 %v1379, %v1380
        %v1382 = vsel %vm907, %v1358, 0.0
        %v1383 = vrot.slane %v1382, 4
        %v1384 = vadd.f32 %v1382, %v1383
        %v1385 = vrot.slane %v1384, 2
        %v1386 = vadd.f32 %v1384, %v1385
        %v1387 = vrot.slane %v1386, 1
        %v1388 = vadd.f32 %v1386, %v1387
        %v1389 = vld [vmem:[%s838] sm:$0xf]
        %v1391 = vlaneseq
        %v1392 = vshrl.u32 %v1391, 7
        %v1393 = vsub.s32 0, %v1392
        %v1394 = vrot.slane %v1389, %v1393
        %v1395 = vlaneseq
        %v1396 = vshrl.u32 %v1395, 7
        %v1397 = vsub.s32 1, %v1396
        %v1398 = vrot.slane %v1389, %v1397
        %v1399 = vlaneseq
        %v1400 = vshrl.u32 %v1399, 7
        %v1401 = vsub.s32 2, %v1400
        %v1402 = vrot.slane %v1389, %v1401
        %v1403 = vlaneseq
        %v1404 = vshrl.u32 %v1403, 7
        %v1405 = vsub.s32 3, %v1404
        %v1406 = vrot.slane %v1389, %v1405
        %v1411 = vmul.f32 %v1030, %v1394
        %v1412 = vmul.f32 %v1031, %v1398
        %v1413 = vmul.f32 %v1032, %v1402
        %v1414 = vmul.f32 %v1033, %v1406
        %v1415 = vadd.f32 %v1367, %v1411
        %v1416 = vadd.f32 %v1374, %v1412
        %v1417 = vadd.f32 %v1381, %v1413
        %v1418 = vadd.f32 %v1388, %v1414
        %v1423 = vcombine.low %v1415, %v1416
        %v1424 = vcombine.low %v1417, %v1418
        %v1426 = vunpack.c.l.s4 1966171168
        %v1427 = vunpack.c.0.s8 %v1426
        %v1428 = vlaneseq
        %v1429 = vshrl.u32 %v1428, 7
        %v1430 = vsub.s32 %v1427, %v1429
        %v1431 = vrot.slane %v1423, %v1430
        %v1433 = vunpack.c.l.s4 1966171168
        %v1434 = vunpack.c.0.s8 %v1433
        %v1435 = vlaneseq
        %v1436 = vshrl.u32 %v1435, 7
        %v1437 = vsub.s32 %v1434, %v1436
        %v1438 = vrot.slane %v1424, %v1437
        %v1439 = vcombine.low %v1431, %v1438
        %v1441 = vunpack.c.l.s4 1966171168
        %v1442 = vunpack.c.0.s8 %v1441
        %v1443 = vlaneseq
        %v1444 = vshrl.u32 %v1443, 7
        %v1445 = vsub.s32 %v1442, %v1444
        %v1446 = vrot.slane %v1439, %v1445
        %1448 = vst.msk [vmem:[%s742] sm:$0xf] %vm1076, %v1446
        %v1449 = vld [vmem:[%s819] sm:$0xff]
        %v1450 = vld [vmem:[%s819 + $0x8] sm:$0xff]
        %v1451 = vsub.f32 %v1449, 1.0
        %v1452 = vsub.f32 %v1450, 1.0
        %v1453 = vand.u32 2147483647, %v1451
        %v1454 = vand.u32 2147483647, %v1452
        %v1455 = vsub.f32 0.0, %v1453
        %v1456 = vsub.f32 0.0, %v1454
        %v1457 = vmul.f32 %v1455, 1.442695
        %v1458 = vpow.pop %v1457
        %v1459 = vmul.f32 %v1456, 1.442695
        %v1460 = vpow.pop %v1459
        %v1461 = vadd.f32 %v1458, 1.0
        %v1462 = vadd.f32 %v1460, 1.0
        %v1463 = vrcp.pop %v1461
        %v1464 = vrcp.pop %v1462
        %v1465 = vmul.f32 %v1461, %v1463
        %v1466 = vmul.f32 %v1462, %v1464
        %v1467 = vsub.f32 2.0, %v1465
        %v1468 = vsub.f32 2.0, %v1466
        %v1469 = vmul.f32 %v1463, %v1467
        %v1470 = vmul.f32 %v1464, %v1468
        %vm1471 = vcmp.ge.f32.partialorder %v1451, 0.0
        %vm1472 = vcmp.ge.f32.partialorder %v1452, 0.0
        %v1473 = vmul.f32 %v1458, %v1469
        %v1474 = vmul.f32 %v1460, %v1470
        %v1475 = vsel %vm1471, %v1469, %v1473
        %v1476 = vsel %vm1472, %v1470, %v1474
        %1477 = vst [vmem:[%s749] sm:$0xff] %v1475
        %1478 = vst [vmem:[%s749 + $0x8] sm:$0xff] %v1476
        %v1479 = vmul.f32 %v978, %v1016
        %v1480 = vmul.f32 %v985, %v1017
        %v1481 = vmul.f32 %v992, %v1018
        %v1482 = vmul.f32 %v999, %v1019
        %v1483 = vld [vmem:[%s847] sm:$0xf]
        %v1488 = vcombine.low %v1479, %v1480
        %v1489 = vcombine.low %v1481, %v1482
        %v1491 = vunpack.c.l.s4 1966171168
        %v1492 = vunpack.c.0.s8 %v1491
        %v1493 = vlaneseq
        %v1494 = vshrl.u32 %v1493, 7
        %v1495 = vsub.s32 %v1492, %v1494
        %v1496 = vrot.slane %v1488, %v1495
        %v1498 = vunpack.c.l.s4 1966171168
        %v1499 = vunpack.c.0.s8 %v1498
        %v1500 = vlaneseq
        %v1501 = vshrl.u32 %v1500, 7
        %v1502 = vsub.s32 %v1499, %v1501
        %v1503 = vrot.slane %v1489, %v1502
        %v1504 = vcombine.low %v1496, %v1503
        %v1506 = vunpack.c.l.s4 1966171168
        %v1507 = vunpack.c.0.s8 %v1506
        %v1508 = vlaneseq
        %v1509 = vshrl.u32 %v1508, 7
        %v1510 = vsub.s32 %v1507, %v1509
        %v1511 = vrot.slane %v1504, %v1510
        %v1513 = vsub.f32 %v1483, %v1511
        %v1514 = vmax.f32 %v1513, 0.0
        %1515 = vst.msk [vmem:[%s756] sm:$0xf] %vm1076, %v1514
        %v1516 = vld [vmem:[%s640] sm:$0xff]
        %v1517 = vld [vmem:[%s640 + $0x8] sm:$0xff]
        %v1518 = vld [vmem:[%s640 + $0x10] sm:$0xff]
        %v1519 = vld [vmem:[%s640 + $0x18] sm:$0xff]
        %v1520 = vld [vmem:[%s640 + $0x20] sm:$0xf]
        %v1521 = vld [vmem:[%s640 + $0x28] sm:$0xf]
        %v1522 = vld [vmem:[%s640 + $0x30] sm:$0xf]
        %v1523 = vld [vmem:[%s640 + $0x38] sm:$0xf]
        %1524 = vst [vmem:[%s762] sm:$0xff] %v1516
        %1525 = vst [vmem:[%s762 + $0x8] sm:$0xff] %v1517
        %1526 = vst [vmem:[%s762 + $0x10] sm:$0xff] %v1518
        %1527 = vst [vmem:[%s762 + $0x18] sm:$0xff] %v1519
        %1528 = vst [vmem:[%s762 + $0x20] sm:$0xf] %v1520
        %1529 = vst [vmem:[%s762 + $0x28] sm:$0xf] %v1521
        %1530 = vst [vmem:[%s762 + $0x30] sm:$0xf] %v1522
        %1531 = vst [vmem:[%s762 + $0x38] sm:$0xf] %v1523
        %v1532 = vld [vmem:[%s829] sm:$0x77]
        %v1533 = vld [vmem:[%s829 + $0x8] sm:$0x77]
        %v1536 = vcombine.low %v1532, %v1532
        %v1537 = vcombine.low %v1533, %v1533
        %1540 = vst [vmem:[%s762 + $0x20] sm:$0x70] %v1536
        %1541 = vst [vmem:[%s762 + $0x28] sm:$0x70] %v1532
        %1542 = vst [vmem:[%s762 + $0x30] sm:$0x70] %v1537
        %1543 = vst [vmem:[%s762 + $0x38] sm:$0x70] %v1533
        %v1544 = vld [vmem:[%s809] sm:$0xff]
        %v1545 = vld [vmem:[%s809 + $0x8] sm:$0xff]
        %v1548 = vcombine.high %v1544, %v1544
        %v1549 = vcombine.high %v1545, %v1545
        %1552 = vst [vmem:[%s881] sm:$0xf] %v1544
        %1553 = vst [vmem:[%s881 + $0x8] sm:$0xf] %v1548
        %1554 = vst [vmem:[%s881 + $0x10] sm:$0xf] %v1545
        %1555 = vst [vmem:[%s881 + $0x18] sm:$0xf] %v1549
        %v1556 = vld [vmem:[%s838] sm:$0xf]
        %s1557 = scalar_lea.vmem %s881, 4
        %1558 = vst.msk [vmem:[%s1557] ss:$8 sm:$0xf] %vm1076, %v1556
        %1559 = vst.msk [vmem:[%s1557] ss:$8 sm:$0x0] %vm1076, %v1556
        %v1560 = vmul.f32 %v1000, 0.8
        %v1561 = vmul.f32 %v1001, 0.8
        %v1562 = vmul.f32 %v1002, 0.8
        %v1563 = vmul.f32 %v1003, 0.8
        %v1568 = vcombine.low %v1560, %v1561
        %v1569 = vcombine.low %v1562, %v1563
        %vm1572 = vcmp.gt.f32.partialorder %v951, %v1568
        %vm1573 = vcmp.gt.f32.partialorder %v953, %v1569
        %v1574 = vsel %vm1572, 1, 0
        %v1575 = vsel %vm1573, 1, 0
        %v1576 = vcvt.s32.f32 %v1574
        %v1577 = vcvt.s32.f32 %v1575
        %v1580 = vcombine.high %v1576, %v1576
        %v1581 = vcombine.high %v1577, %v1577
        %v1584 = vsel %vm907, %v1576, 0.0
        %v1585 = vsel %vm907, %v1580, 0.0
        %v1586 = vadd.f32 %v1584, %v1585
        %v1587 = vsel %vm907, %v1577, 0.0
        %v1588 = vadd.f32 %v1586, %v1587
        %v1589 = vsel %vm907, %v1581, 0.0
        %v1590 = vadd.f32 %v1588, %v1589
        %1591 = vadd.xlane.f32.xlu0 %v1590
        %v1592 = vpop.xlane.xlu0 %1591
        %vm1593 = vcmask 3072
        %1594 = vst.msk [vmem:[%s888] sm:$0xf] %vm1593, %v1592
        %vm1595 = vcmp.gt.f32.partialorder %v1449, 2.3862944
        %vm1596 = vcmp.gt.f32.partialorder %v1450, 2.3862944
        %v1597 = vsel %vm1595, 1, 0
        %v1598 = vsel %vm1596, 1, 0
        %v1599 = vcvt.s32.f32 %v1597
        %v1600 = vcvt.s32.f32 %v1598
        %v1603 = vcombine.high %v1599, %v1599
        %v1604 = vcombine.high %v1600, %v1600
        %v1607 = vsel %vm907, %v1599, 0.0
        %v1608 = vsel %vm907, %v1603, 0.0
        %v1609 = vadd.f32 %v1607, %v1608
        %v1610 = vsel %vm907, %v1600, 0.0
        %v1611 = vadd.f32 %v1609, %v1610
        %v1612 = vsel %vm907, %v1604, 0.0
        %v1613 = vadd.f32 %v1611, %v1612
        %1614 = vadd.xlane.f32.xlu0 %v1613
        %v1615 = vpop.xlane.xlu0 %1614
        %1616 = vst.msk [vmem:[%s896] sm:$0xf] %vm1593, %v1615
        %s1617 = smul.u32 4, %s38
        %p1618 = scmp.lt.s32.totalorder %s37, 1
        %s1619 = scalar_select %p1618, %s37, 1
        %p1620 = scmp.lt.s32.totalorder %s1617, 7
        %s1621 = scalar_select %p1620, %s1617, 7
        %s1622 = smul.addr %s1619, 8
        %s1623 = sadd.s32 %s1621, %s1622
        %s1624 = smul.addr %s1623, 8
        %s1625 = scalar_lea.vmem %s7, %s1624
        %s1626 = smul.u32 4, %s38
        %p1627 = scmp.lt.s32.totalorder %s37, 1
        %s1628 = scalar_select %p1627, %s37, 1
        %p1629 = scmp.lt.s32.totalorder %s1626, 7
        %s1630 = scalar_select %p1629, %s1626, 7
        %s1631 = smul.addr %s1628, 8
        %s1632 = sadd.s32 %s1630, %s1631
        %s1633 = smul.addr %s1632, 4
        %s1634 = scalar_lea.vmem %s8, %s1633
        %s1635 = sand.u32 %s307, 1
        %s1636 = scalar_lea.sflag [#allocation4], %s1635
        %s1637 = sand.u32 %s307, 1
        %s1638 = smul.addr %s1637, 4
        %s1639 = scalar_lea.vmem [#allocation3], %s1638
        %s1640 = sand.u32 %s33, 1
        %s1641 = scalar_lea.sflag [#allocation6], %s1640
        %s1642 = sand.u32 %s335, 1
        %s1643 = smul.addr %s1642, 16
        %s1644 = scalar_lea.vmem [#allocation5], %s1643
        %s1645 = sand.u32 %s33, 1
        %s1646 = scalar_lea.sflag [#allocation6], %s1645
        %s1647 = sand.u32 %s363, 1
        %s1648 = smul.addr %s1647, 4
        %s1649 = scalar_lea.vmem [#allocation7], %s1648
        %s1650 = sand.u32 %s391, 1
        %s1651 = sand.u32 %s391, 1
        %s1652 = smul.addr %s1651, 64
        %s1653 = scalar_lea.vmem [#allocation8], %s1652
        %s1654 = smul.u32 4, %s38
        %p1655 = scmp.lt.s32.totalorder %s37, 1
        %s1656 = scalar_select %p1655, %s37, 1
        %p1657 = scmp.lt.s32.totalorder %s1654, 7
        %s1658 = scalar_select %p1657, %s1654, 7
        %s1659 = smul.addr %s1656, 8
        %s1660 = sadd.s32 %s1658, %s1659
        %s1661 = smul.addr %s1660, 8
        %s1662 = scalar_lea.vmem %s13, %s1661
        %s1663 = smul.u32 %s37, 2
        %s1664 = sadd.s32 %s1663, %s38
        %p1665 = scmp.lt.s32.totalorder %s1664, 3
        %s1666 = scalar_select %p1665, %s1664, 3
        %s1667 = smul.addr %s1666, 4
        %s1668 = scalar_lea.vmem %s14, %s1667
        %s1669 = smul.u32 %s37, 2
        %s1670 = sadd.s32 %s1669, %s38
        %p1671 = scmp.lt.s32.totalorder %s1670, 3
        %s1672 = scalar_select %p1671, %s1670, 3
        %s1673 = smul.addr %s1672, 4
        %s1674 = scalar_lea.vmem %s15, %s1673
        // Predicated region
        $region72: #{tpu_custom_call.1} parent=66 // pred_check
          %p1675 = pneg %p261
        $region73: #{tpu_custom_call.1} parent=66 // pred_check_branch
          %1677 = sbr.rel (%p1675) target = $region75
        $region74: #{tpu_custom_call.1} parent=66 // pred_region
          %s1678 = smul.u32 4, %s38
        $region75: #{tpu_custom_call.1} parent=66 // pred_fallthru
          _
        // Predicated region
        $region76: #{tpu_custom_call.1} parent=66 // pred_check
          %p1679 = pneg %p289
        $region77: #{tpu_custom_call.1} parent=66 // pred_check_branch
          %1681 = sbr.rel (%p1679) target = $region79
        $region78: #{tpu_custom_call.1} parent=66 // pred_region
          %s1682 = smul.u32 4, %s38
        $region79: #{tpu_custom_call.1} parent=66 // pred_fallthru
          _
        // Predicated region
        $region80: #{tpu_custom_call.1} parent=66 // pred_check
          %p1683 = pneg %p317
        $region81: #{tpu_custom_call.1} parent=66 // pred_check_branch
          %1685 = sbr.rel (%p1683) target = $region83
        $region82: #{tpu_custom_call.1} parent=66 // pred_region
          %s1686 = smul.u32 4, %s38
          %s1688 = ssub.s32 64, 64
          %1689 = vsyncadd %s1636, %s1688
          %s1690 = smul.addr %s37, 8
          %s1691 = sadd.s32 %s1686, %s1690
          %s1692 = smul.addr %s1691, 16
          %s1693 = scalar_lea.hbm %s9, %s1692
          %s1695 = sshll.u32 %s1639, 4
          %s1696 = int_to_ptr.vmem [resolvable:$true] %s1695
          %1698 = dma.vmem_to_hbm [thread:$0]  %s1696, 64, %s1693, %s1636
        $region83: #{tpu_custom_call.1} parent=66 // pred_fallthru
          _
        // Predicated region
        $region84: #{tpu_custom_call.1} parent=66 // pred_check
          %p1699 = pneg %p345
        $region85: #{tpu_custom_call.1} parent=66 // pred_check_branch
          %1701 = sbr.rel (%p1699) target = $region87
        $region86: #{tpu_custom_call.1} parent=66 // pred_region
          %s1702 = smul.u32 4, %s38
          %s1704 = ssub.s32 256, 256
          %1705 = vsyncadd %s1641, %s1704
          %s1706 = smul.addr %s37, 8
          %s1707 = sadd.s32 %s1702, %s1706
          %s1708 = smul.addr %s1707, 64
          %s1709 = scalar_lea.hbm %s10, %s1708
          %s1711 = sshll.u32 %s1644, 4
          %s1712 = int_to_ptr.vmem [resolvable:$true] %s1711
          %1714 = dma.vmem_to_hbm [thread:$0]  %s1712, 256, %s1709, %s1641
        $region87: #{tpu_custom_call.1} parent=66 // pred_fallthru
          _
        // Predicated region
        $region88: #{tpu_custom_call.1} parent=66 // pred_check
          %p1715 = pneg %p373
        $region89: #{tpu_custom_call.1} parent=66 // pred_check_branch
          %1717 = sbr.rel (%p1715) target = $region91
        $region90: #{tpu_custom_call.1} parent=66 // pred_region
          %s1718 = smul.u32 4, %s38
          %s1720 = ssub.s32 64, 64
          %1721 = vsyncadd %s1646, %s1720
          %s1722 = smul.addr %s37, 8
          %s1723 = sadd.s32 %s1718, %s1722
          %s1724 = smul.addr %s1723, 16
          %s1725 = scalar_lea.hbm %s11, %s1724
          %s1727 = sshll.u32 %s1649, 4
          %s1728 = int_to_ptr.vmem [resolvable:$true] %s1727
          %1730 = dma.vmem_to_hbm [thread:$0]  %s1728, 64, %s1725, %s1646
        $region91: #{tpu_custom_call.1} parent=66 // pred_fallthru
          _
        // Predicated region
        $region92: #{tpu_custom_call.1} parent=66 // pred_check
          %p1731 = pneg %p401
        $region93: #{tpu_custom_call.1} parent=66 // pred_check_branch
          %1733 = sbr.rel (%p1731) target = $region95
        $region94: #{tpu_custom_call.1} parent=66 // pred_region
          %s1734 = smul.u32 4, %s38
          %s1735 = smul.addr %s37, 16
          %s1736 = sadd.s32 %s1734, %s1735
          %s1737 = smul.addr %s1736, 8
          %s1738 = scalar_lea.vmem %s12, %s1737
          // Predicated region
          $region96: #{tpu_custom_call.1} parent=94 // pred_check
            _
          $region97: #{tpu_custom_call.1} parent=94 // pred_check_branch
            %1740 = sbr.rel (0) target = $region99
          $region98: #{tpu_custom_call.1} parent=94 // pred_region
            // Predicated region
            $region100: #{tpu_custom_call.1} parent=98 // pred_check
              _
            $region101: #{tpu_custom_call.1} parent=98 // pred_check_branch
              %1742 = sbr.rel (0) target = $region103
            $region102: #{tpu_custom_call.1} parent=98 // pred_region
              loop: start=0, step=1, limit=1
              $region104: #{tpu_custom_call.1} parent=102 // loop_pre_header
                _
              $region105: #{tpu_custom_call.1} parent=102 // loop_header
                %s1744 = sphi 0, %s1748
                %p1745 = scmp.ge.s32.totalorder %s1744, 1
                %s1749 = sphi %s1653, %s1653
                %s1750 = sphi %s1738, %s1738
              $region106: #{tpu_custom_call.1} parent=102 // loop_header_branch
                %1747 = sbr.rel (%p1745) target = $region110
              $region107: #{tpu_custom_call.1} parent=102 // loop_body
                %v1751 = vld [vmem:[%s1749] sm:$0xff]
                %1752 = vst [vmem:[%s1750] sm:$0xff] %v1751
                %v1753 = vld [vmem:[%s1749 + $0x8] sm:$0xff]
                %1754 = vst [vmem:[%s1750 + $0x8] sm:$0xff] %v1753
                %v1755 = vld [vmem:[%s1749 + $0x10] sm:$0xff]
                %1756 = vst [vmem:[%s1750 + $0x10] sm:$0xff] %v1755
                %v1757 = vld [vmem:[%s1749 + $0x18] sm:$0xff]
                %1758 = vst [vmem:[%s1750 + $0x18] sm:$0xff] %v1757
                %v1759 = vld [vmem:[%s1749 + $0x20] sm:$0xff]
                %1760 = vst [vmem:[%s1750 + $0x40] sm:$0xff] %v1759
                %v1761 = vld [vmem:[%s1749 + $0x28] sm:$0xff]
                %1762 = vst [vmem:[%s1750 + $0x48] sm:$0xff] %v1761
                %v1763 = vld [vmem:[%s1749 + $0x30] sm:$0xff]
                %1764 = vst [vmem:[%s1750 + $0x50] sm:$0xff] %v1763
                %v1765 = vld [vmem:[%s1749 + $0x38] sm:$0xff]
                %1766 = vst [vmem:[%s1750 + $0x58] sm:$0xff] %v1765
              $region108: #{tpu_custom_call.1} parent=102 // loop_footer
                %s1748 = sadd.s32 1, %s1744
              $region109: #{tpu_custom_call.1} parent=102 // loop_footer_branch
                %1743 = sbr.rel target = $region105
              $region110: #{tpu_custom_call.1} parent=102 // loop_exit
                _
            $region103: #{tpu_custom_call.1} parent=98 // pred_fallthru
              _
            // Predicated region
            $region111: #{tpu_custom_call.1} parent=98 // pred_check
              _
            $region112: #{tpu_custom_call.1} parent=98 // pred_check_branch
              %1768 = sbr.rel target = $region114
            $region113: #{tpu_custom_call.1} parent=98 // pred_region
              _
            $region114: #{tpu_custom_call.1} parent=98 // pred_fallthru
              _
          $region99: #{tpu_custom_call.1} parent=94 // pred_fallthru
            _
          %1769 = vnop
        $region95: #{tpu_custom_call.1} parent=66 // pred_fallthru
          _
        // Predicated region
        $region115: #{tpu_custom_call.1} parent=66 // pred_check
          %p1770 = pneg %p429
        $region116: #{tpu_custom_call.1} parent=66 // pred_check_branch
          %1772 = sbr.rel (%p1770) target = $region118
        $region117: #{tpu_custom_call.1} parent=66 // pred_region
          %s1773 = smul.u32 4, %s38
        $region118: #{tpu_custom_call.1} parent=66 // pred_fallthru
          _
        // Predicated region
        $region119: #{tpu_custom_call.1} parent=66 // pred_check
          %p1774 = pneg %p459
        $region120: #{tpu_custom_call.1} parent=66 // pred_check_branch
          %1776 = sbr.rel (%p1774) target = $region122
        $region121: #{tpu_custom_call.1} parent=66 // pred_region
          %s1777 = smul.u32 %s37, 2
          %s1778 = sadd.s32 %s1777, %s38
        $region122: #{tpu_custom_call.1} parent=66 // pred_fallthru
          _
        // Predicated region
        $region123: #{tpu_custom_call.1} parent=66 // pred_check
          %p1779 = pneg %p489
        $region124: #{tpu_custom_call.1} parent=66 // pred_check_branch
          %1781 = sbr.rel (%p1779) target = $region126
        $region125: #{tpu_custom_call.1} parent=66 // pred_region
          %s1782 = smul.u32 %s37, 2
          %s1783 = sadd.s32 %s1782, %s38
        $region126: #{tpu_custom_call.1} parent=66 // pred_fallthru
          _
      $region67: #{tpu_custom_call.1} parent=5 // pred_fallthru
        _
      %p1784 = scmp.le.s32.totalorder 2, %s28
      // Predicated region
      $region127: #{tpu_custom_call.1} parent=5 // pred_check
        %p1785 = pneg %p1784
      $region128: #{tpu_custom_call.1} parent=5 // pred_check_branch
        %1787 = sbr.rel (%p1785) target = $region130
      $region129: #{tpu_custom_call.1} parent=5 // pred_region
        %s1788 = ssub.s32 %s28, 2
        // Predicated region
        $region131: #{tpu_custom_call.1} parent=129 // pred_check
          %p1789 = pneg %p267
        $region132: #{tpu_custom_call.1} parent=129 // pred_check_branch
          %1791 = sbr.rel (%p1789) target = $region134
        $region133: #{tpu_custom_call.1} parent=129 // pred_region
          %s1792 = smul.u32 4, %s40
          %p1793 = scmp.lt.s32.totalorder %s39, 1
          %s1794 = scalar_select %p1793, %s39, 1
          %p1795 = scmp.lt.s32.totalorder %s1792, 7
          %s1796 = scalar_select %p1795, %s1792, 7
          %s1797 = smul.addr %s1794, 8
          %s1798 = sadd.s32 %s1796, %s1797
          %s1799 = smul.addr %s1798, 8
          %s1800 = scalar_lea.vmem %s7, %s1799
        $region134: #{tpu_custom_call.1} parent=129 // pred_fallthru
          _
        // Predicated region
        $region135: #{tpu_custom_call.1} parent=129 // pred_check
          %p1801 = pneg %p295
        $region136: #{tpu_custom_call.1} parent=129 // pred_check_branch
          %1803 = sbr.rel (%p1801) target = $region138
        $region137: #{tpu_custom_call.1} parent=129 // pred_region
          %s1804 = smul.u32 4, %s40
          %p1805 = scmp.lt.s32.totalorder %s39, 1
          %s1806 = scalar_select %p1805, %s39, 1
          %p1807 = scmp.lt.s32.totalorder %s1804, 7
          %s1808 = scalar_select %p1807, %s1804, 7
          %s1809 = smul.addr %s1806, 8
          %s1810 = sadd.s32 %s1808, %s1809
          %s1811 = smul.addr %s1810, 4
          %s1812 = scalar_lea.vmem %s8, %s1811
        $region138: #{tpu_custom_call.1} parent=129 // pred_fallthru
          _
        // Predicated region
        $region139: #{tpu_custom_call.1} parent=129 // pred_check
          %p1813 = pneg %p323
        $region140: #{tpu_custom_call.1} parent=129 // pred_check_branch
          %1815 = sbr.rel (%p1813) target = $region142
        $region141: #{tpu_custom_call.1} parent=129 // pred_region
          %s1816 = sand.u32 %s308, 1
          %s1817 = scalar_lea.sflag [#allocation4], %s1816
          %s1818 = sand.u32 %s308, 1
          %s1819 = smul.addr %s1818, 4
          %s1820 = scalar_lea.vmem [#allocation3], %s1819
          %1821 = dma.done %s1817, 64
        $region142: #{tpu_custom_call.1} parent=129 // pred_fallthru
          _
        // Predicated region
        $region143: #{tpu_custom_call.1} parent=129 // pred_check
          %p1822 = pneg %p351
        $region144: #{tpu_custom_call.1} parent=129 // pred_check_branch
          %1824 = sbr.rel (%p1822) target = $region146
        $region145: #{tpu_custom_call.1} parent=129 // pred_region
          %s1825 = sand.u32 %s34, 1
          %s1826 = scalar_lea.sflag [#allocation6], %s1825
          %s1827 = sand.u32 %s336, 1
          %s1828 = smul.addr %s1827, 16
          %s1829 = scalar_lea.vmem [#allocation5], %s1828
          %1830 = dma.done %s1826, 256
        $region146: #{tpu_custom_call.1} parent=129 // pred_fallthru
          _
        // Predicated region
        $region147: #{tpu_custom_call.1} parent=129 // pred_check
          %p1831 = pneg %p379
        $region148: #{tpu_custom_call.1} parent=129 // pred_check_branch
          %1833 = sbr.rel (%p1831) target = $region150
        $region149: #{tpu_custom_call.1} parent=129 // pred_region
          %s1834 = sand.u32 %s34, 1
          %s1835 = scalar_lea.sflag [#allocation6], %s1834
          %s1836 = sand.u32 %s364, 1
          %s1837 = smul.addr %s1836, 4
          %s1838 = scalar_lea.vmem [#allocation7], %s1837
          %1839 = dma.done %s1835, 64
        $region150: #{tpu_custom_call.1} parent=129 // pred_fallthru
          _
        // Predicated region
        $region151: #{tpu_custom_call.1} parent=129 // pred_check
          %p1840 = pneg %p407
        $region152: #{tpu_custom_call.1} parent=129 // pred_check_branch
          %1842 = sbr.rel (%p1840) target = $region154
        $region153: #{tpu_custom_call.1} parent=129 // pred_region
          %s1843 = sand.u32 %s392, 1
          %s1844 = sand.u32 %s392, 1
          %s1845 = smul.addr %s1844, 64
          %s1846 = scalar_lea.vmem [#allocation8], %s1845
        $region154: #{tpu_custom_call.1} parent=129 // pred_fallthru
          _
        // Predicated region
        $region155: #{tpu_custom_call.1} parent=129 // pred_check
          %p1847 = pneg %p435
        $region156: #{tpu_custom_call.1} parent=129 // pred_check_branch
          %1849 = sbr.rel (%p1847) target = $region158
        $region157: #{tpu_custom_call.1} parent=129 // pred_region
          %s1850 = smul.u32 4, %s40
          %p1851 = scmp.lt.s32.totalorder %s39, 1
          %s1852 = scalar_select %p1851, %s39, 1
          %p1853 = scmp.lt.s32.totalorder %s1850, 7
          %s1854 = scalar_select %p1853, %s1850, 7
          %s1855 = smul.addr %s1852, 8
          %s1856 = sadd.s32 %s1854, %s1855
          %s1857 = smul.addr %s1856, 8
          %s1858 = scalar_lea.vmem %s13, %s1857
        $region158: #{tpu_custom_call.1} parent=129 // pred_fallthru
          _
        // Predicated region
        $region159: #{tpu_custom_call.1} parent=129 // pred_check
          %p1859 = pneg %p465
        $region160: #{tpu_custom_call.1} parent=129 // pred_check_branch
          %1861 = sbr.rel (%p1859) target = $region162
        $region161: #{tpu_custom_call.1} parent=129 // pred_region
          %s1862 = smul.u32 %s39, 2
          %s1863 = sadd.s32 %s1862, %s40
          %p1864 = scmp.lt.s32.totalorder %s1863, 3
          %s1865 = scalar_select %p1864, %s1863, 3
          %s1866 = smul.addr %s1865, 4
          %s1867 = scalar_lea.vmem %s14, %s1866
        $region162: #{tpu_custom_call.1} parent=129 // pred_fallthru
          _
        // Predicated region
        $region163: #{tpu_custom_call.1} parent=129 // pred_check
          %p1868 = pneg %p495
        $region164: #{tpu_custom_call.1} parent=129 // pred_check_branch
          %1870 = sbr.rel (%p1868) target = $region166
        $region165: #{tpu_custom_call.1} parent=129 // pred_region
          %s1871 = smul.u32 %s39, 2
          %s1872 = sadd.s32 %s1871, %s40
          %p1873 = scmp.lt.s32.totalorder %s1872, 3
          %s1874 = scalar_select %p1873, %s1872, 3
          %s1875 = smul.addr %s1874, 4
          %s1876 = scalar_lea.vmem %s15, %s1875
        $region166: #{tpu_custom_call.1} parent=129 // pred_fallthru
          _
      $region130: #{tpu_custom_call.1} parent=5 // pred_fallthru
        _
    $region6: #{tpu_custom_call.1} parent=1 // loop_footer
      %s32 = sadd.s32 1, %s28
    $region7: #{tpu_custom_call.1} parent=1 // loop_footer_branch
      %27 = sbr.rel target = $region3
    $region8: #{tpu_custom_call.1} parent=1 // loop_exit
      _
    %1877 = vsyncpa [#allocation4], 1
    %s1878 = scalar_lea.sflag [#allocation4], 1
    %1879 = vsyncpa %s1878, 1
    %1880 = vsyncpa [#allocation6], 1
    %s1881 = scalar_lea.sflag [#allocation6], 1
    %1882 = vsyncpa %s1881, 1

</llo_original>
